<compile_context>
chip_gen: v5e
topology: v5e:2x2
jax: 0.10.0
libtpu: 0.0.40
codegen_flags: <defaults>
</compile_context>

<pallas_src>
import functools

import jax
import jax.numpy as jnp
from jax import lax
from jax.experimental import pallas as pl
from jax.experimental.pallas import tpu as pltpu

BN_EPS = 1e-5          # torch.nn.BatchNorm1d default eps
LEAKY_SLOPE = 0.15     # FcnHistory default leaky_relu


def _leaky_relu(h):
    return jnp.where(h >= 0.0, h, LEAKY_SLOPE * h)


def _bn_eval(h, g, beta, rm, rv):
    # Reference-only BatchNorm1d eval transform (kernel uses folded weights).
    return (h - rm) * lax.rsqrt(rv + BN_EPS) * g + beta


# ------------------------------------------------------------------
# single fused kernel: whole FcnHistory forward for one batch block
# (all BatchNorms already folded into the Linear weights/biases)
# ------------------------------------------------------------------
def fcn_history_kernel(x_ref, yh_ref, *refs, n_main_bn, n_out_bn):
    refs = list(refs)
    out_ref = refs.pop()                 # output comes after all inputs
    it = iter(refs)

    def take(n):
        return [next(it) for _ in range(n)]

    def dense(h, w_ref, b_ref=None):
        # bf16 operands on the MXU, f32 accumulation, f32 bias add.
        acc = jnp.dot(h.astype(jnp.bfloat16), w_ref[...],
                      preferred_element_type=jnp.float32)
        if b_ref is not None:
            acc = acc + b_ref[...]
        return acc

    # ---- main_layers(x): (Linear+BN+LeakyReLU)*n, then plain Linear ----
    h = x_ref[...]
    for _ in range(n_main_bn):
        w, b = take(2)
        h = _leaky_relu(dense(h, w, b))
    w1, b1 = take(2)                     # mid-BN scale folded into w1/b1
    h1 = dense(h, w1, b1)

    # ---- output_history_layer(yh) (mid-BN scale folded, bias merged) ----
    (w2,) = take(1)
    h2 = dense(yh_ref[...], w2)

    # ---- non_linear_ops(h1 + h2): BN(folded) -> Dropout(no-op) -> LeakyReLU
    h = _leaky_relu(h1 + h2)

    # ---- output_layer ----
    for _ in range(n_out_bn):
        w, b = take(2)
        h = _leaky_relu(dense(h, w, b))
    wo, bo = take(2)
    out_ref[...] = dense(h, wo, bo)      # lane-dense padded projection


# ------------------------------------------------------------------
# wrapper: folds BN into Linear, pads output lane-dense, calls pallas
# ------------------------------------------------------------------
def fcn_history_forward(x, yh, params, *, num_batch_blocks=2):
    B, in_dim = x.shape
    mem_dim = yh.shape[1]

    # batch tiling: fall back to one block if constraints are not met
    if B % num_batch_blocks != 0:
        num_batch_blocks = 1
    bb = B // num_batch_blocks
    if bb % 8 != 0 and bb != B:
        num_batch_blocks = 1
        bb = B

    output_size = params["out_final"]["w"].shape[1]
    o_pad = (-output_size) % 128
    o_dim = output_size + o_pad

    def w16(w):
        return w.astype(jnp.bfloat16)

    def fold_bn(w, b, bn):
        # Linear -> BatchNorm1d(eval)  ==  Linear with scaled W, shifted b
        s = bn["g"] * lax.rsqrt(bn["rv"] + BN_EPS)          # (1, out)
        return w * s, (b - bn["rm"]) * s + bn["beta"]

    flat = []
    for blk in params["main_bn"]:
        wf, bf = fold_bn(blk["w"], blk["b"], blk)
        flat += [w16(wf), bf]

    # mid BN folded into main_final and hist; all bias terms merged into b1
    mid = params["mid_bn"]
    s_mid = mid["g"] * lax.rsqrt(mid["rv"] + BN_EPS)        # (1, hidden)
    w1 = params["main_final"]["w"] * s_mid
    w2 = params["hist"]["w"] * s_mid
    b1 = ((params["main_final"]["b"] + params["hist"]["b"] - mid["rm"])
          * s_mid + mid["beta"])
    flat += [w16(w1), b1, w16(w2)]

    for blk in params["out_bn"]:
        wf, bf = fold_bn(blk["w"], blk["b"], blk)
        flat += [w16(wf), bf]

    # pad the output head to a multiple of 128 lanes -> unmasked stores
    w_out = jnp.pad(params["out_final"]["w"], ((0, 0), (0, o_pad)))
    b_out = jnp.pad(params["out_final"]["b"], ((0, 0), (0, o_pad)))
    flat += [w16(w_out), b_out]

    kernel = functools.partial(
        fcn_history_kernel,
        n_main_bn=len(params["main_bn"]),
        n_out_bn=len(params["out_bn"]))

    param_specs = [pl.BlockSpec(p.shape, lambda i: (0, 0)) for p in flat]

    out = pl.pallas_call(
        kernel,
        out_shape=jax.ShapeDtypeStruct((B, o_dim), jnp.float32),
        grid=(num_batch_blocks,),
        in_specs=[pl.BlockSpec((bb, in_dim), lambda i: (i, 0)),
                  pl.BlockSpec((bb, mem_dim), lambda i: (i, 0))] + param_specs,
        out_specs=pl.BlockSpec((bb, o_dim), lambda i: (i, 0)),
        compiler_params=pltpu.CompilerParams(
            dimension_semantics=("parallel",)),   # megacore sharding on v7x
    )(x, yh, *flat)
    return out[:, :output_size]


# ------------------------------------------------------------------
# deterministic parameter init (shapes per FcnHistory.__init__)
# ------------------------------------------------------------------
def init_params(key, input_size, hidden_size, output_size, num_layers,
                num_output_layers=1, memory_size=None):
    if memory_size is None:
        memory_size = output_size
    num_main = num_layers - num_output_layers
    n_main_bn = num_main - 1 if num_main >= 2 else 0
    n_out_bn = num_output_layers - 1

    def dense(k, fin, fout):
        kw, kb = jax.random.split(k)
        bound = 1.0 / (fin ** 0.5)
        w = jax.random.uniform(kw, (fin, fout), jnp.float32, -bound, bound)
        b = jax.random.uniform(kb, (1, fout), jnp.float32, -bound, bound)
        return w, b

    def bn(k, n):
        k1, k2, k3, k4 = jax.random.split(k, 4)
        return dict(
            g=1.0 + 0.05 * jax.random.normal(k1, (1, n), jnp.float32),
            beta=0.05 * jax.random.normal(k2, (1, n), jnp.float32),
            rm=0.05 * jax.random.normal(k3, (1, n), jnp.float32),
            rv=jax.random.uniform(k4, (1, n), jnp.float32, 0.8, 1.2))

    keys = iter(jax.random.split(key, n_main_bn + n_out_bn + 4))

    main_bn, fin = [], input_size
    for _ in range(n_main_bn):
        kd, kb = jax.random.split(next(keys))
        w, b = dense(kd, fin, hidden_size)
        main_bn.append(dict(w=w, b=b, **bn(kb, hidden_size)))
        fin = hidden_size
    w, b = dense(next(keys), fin, hidden_size)
    main_final = dict(w=w, b=b)

    w, b = dense(next(keys), memory_size, hidden_size)
    hist = dict(w=w, b=b)

    mid_bn = bn(next(keys), hidden_size)

    out_bn = []
    for _ in range(n_out_bn):
        kd, kb = jax.random.split(next(keys))
        w, b = dense(kd, hidden_size, hidden_size)
        out_bn.append(dict(w=w, b=b, **bn(kb, hidden_size)))
    w, b = dense(next(keys), hidden_size, output_size)
    out_final = dict(w=w, b=b)

    return dict(main_bn=main_bn, main_final=main_final, hist=hist,
                mid_bn=mid_bn, out_bn=out_bn, out_final=out_final)


# ------------------------------------------------------------------
# pure-JAX reference (f32, explicit BatchNorms) for a correctness check
# ------------------------------------------------------------------
def reference_forward(x, yh, params):
    def dense(h, p):
        return h @ p["w"] + p["b"]

    def block(h, p):
        h = dense(h, p)
        h = _bn_eval(h, p["g"], p["beta"], p["rm"], p["rv"])
        return _leaky_relu(h)

    h = x
    for blk in params["main_bn"]:
        h = block(h, blk)
    h1 = dense(h, params["main_final"])
    h2 = dense(yh, params["hist"])
    m = params["mid_bn"]
    h = _leaky_relu(_bn_eval(h1 + h2, m["g"], m["beta"], m["rm"], m["rv"]))
    for blk in params["out_bn"]:
        h = block(h, blk)
    return dense(h, params["out_final"])


if __name__ == "__main__":
    # small, self-consistent config (defaults scaled down: hidden 512 -> 128)
    input_size = 52        # 26 * 2 (module default)
    output_size = 52       # 26 * 2 (module default); memory_size = output_size
    hidden_size = 128
    num_layers = 7
    num_output_layers = 1
    B = 16

    key = jax.random.PRNGKey(0)
    kx, ky, kp = jax.random.split(key, 3)
    x = jax.random.normal(kx, (B, input_size), jnp.float32)
    yh = jax.random.normal(ky, (B, output_size), jnp.float32)   # output history
    params = init_params(kp, input_size, hidden_size, output_size,
                         num_layers, num_output_layers)

    y = fcn_history_forward(x, yh, params, num_batch_blocks=2)
    y = jax.block_until_ready(y)

    assert y.shape == (B, output_size), y.shape
    assert bool(jnp.all(jnp.isfinite(y)))

    y_ref = reference_forward(x, yh, params)
    err = float(jnp.max(jnp.abs(y - y_ref)))
    # loose tolerance: kernel uses bf16 MXU operands with f32 accumulation
    assert err < 1e-1, err

    print("KERNEL_OK")
</pallas_src>

<mosaic_0001>
module attributes {stable_mosaic.version = 11 : i64} {
  func.func @fcn_history_kernel(%arg0: i32, %arg1: memref<8x52xf32, #tpu.memory_space<vmem>>, %arg2: memref<8x52xf32, #tpu.memory_space<vmem>>, %arg3: memref<52x128xbf16, #tpu.memory_space<vmem>>, %arg4: memref<1x128xf32, #tpu.memory_space<vmem>>, %arg5: memref<128x128xbf16, #tpu.memory_space<vmem>>, %arg6: memref<1x128xf32, #tpu.memory_space<vmem>>, %arg7: memref<128x128xbf16, #tpu.memory_space<vmem>>, %arg8: memref<1x128xf32, #tpu.memory_space<vmem>>, %arg9: memref<128x128xbf16, #tpu.memory_space<vmem>>, %arg10: memref<1x128xf32, #tpu.memory_space<vmem>>, %arg11: memref<128x128xbf16, #tpu.memory_space<vmem>>, %arg12: memref<1x128xf32, #tpu.memory_space<vmem>>, %arg13: memref<128x128xbf16, #tpu.memory_space<vmem>>, %arg14: memref<1x128xf32, #tpu.memory_space<vmem>>, %arg15: memref<52x128xbf16, #tpu.memory_space<vmem>>, %arg16: memref<128x128xbf16, #tpu.memory_space<vmem>>, %arg17: memref<1x128xf32, #tpu.memory_space<vmem>>, %arg18: memref<8x128xf32, #tpu.memory_space<vmem>>) attributes {dimension_semantics = [#tpu.dimension_semantics<parallel>], iteration_bounds = array<i64: 2>, scalar_prefetch = 0 : i64, scratch_operands = 0 : i64, tpu.core_type = #tpu.core_type<tc>, window_params = [{transform_indices = @transform_0, window_bounds = array<i64: 8, 52>}, {transform_indices = @transform_1, window_bounds = array<i64: 8, 52>}, {pipeline_mode = #tpu.pipeline_mode<synchronous>, transform_indices = @transform_2, window_bounds = array<i64: 52, 128>}, {pipeline_mode = #tpu.pipeline_mode<synchronous>, transform_indices = @transform_3, window_bounds = array<i64: 1, 128>}, {pipeline_mode = #tpu.pipeline_mode<synchronous>, transform_indices = @transform_4, window_bounds = array<i64: 128, 128>}, {pipeline_mode = #tpu.pipeline_mode<synchronous>, transform_indices = @transform_5, window_bounds = array<i64: 1, 128>}, {pipeline_mode = #tpu.pipeline_mode<synchronous>, transform_indices = @transform_6, window_bounds = array<i64: 128, 128>}, {pipeline_mode = #tpu.pipeline_mode<synchronous>, transform_indices = @transform_7, window_bounds = array<i64: 1, 128>}, {pipeline_mode = #tpu.pipeline_mode<synchronous>, transform_indices = @transform_8, window_bounds = array<i64: 128, 128>}, {pipeline_mode = #tpu.pipeline_mode<synchronous>, transform_indices = @transform_9, window_bounds = array<i64: 1, 128>}, {pipeline_mode = #tpu.pipeline_mode<synchronous>, transform_indices = @transform_10, window_bounds = array<i64: 128, 128>}, {pipeline_mode = #tpu.pipeline_mode<synchronous>, transform_indices = @transform_11, window_bounds = array<i64: 1, 128>}, {pipeline_mode = #tpu.pipeline_mode<synchronous>, transform_indices = @transform_12, window_bounds = array<i64: 128, 128>}, {pipeline_mode = #tpu.pipeline_mode<synchronous>, transform_indices = @transform_13, window_bounds = array<i64: 1, 128>}, {pipeline_mode = #tpu.pipeline_mode<synchronous>, transform_indices = @transform_14, window_bounds = array<i64: 52, 128>}, {pipeline_mode = #tpu.pipeline_mode<synchronous>, transform_indices = @transform_15, window_bounds = array<i64: 128, 128>}, {pipeline_mode = #tpu.pipeline_mode<synchronous>, transform_indices = @transform_16, window_bounds = array<i64: 1, 128>}, {transform_indices = @transform_17, window_bounds = array<i64: 8, 128>}]} {
    %c0 = arith.constant 0 : index
    %c0_0 = arith.constant 0 : index
    %0 = vector.load %arg1[%c0, %c0_0] : memref<8x52xf32, #tpu.memory_space<vmem>>, vector<8x52xf32>
    %1 = arith.truncf %0 : vector<8x52xf32> to vector<8x52xbf16>
    %c0_1 = arith.constant 0 : index
    %c0_2 = arith.constant 0 : index
    %2 = vector.load %arg3[%c0_1, %c0_2] : memref<52x128xbf16, #tpu.memory_space<vmem>>, vector<52x128xbf16>
    %cst = arith.constant dense<0.000000e+00> : vector<8x128xf32>
    %3 = tpu.matmul %1, %2, %cst {dimension_numbers = #tpu.dot_dimension_numbers<[1], [0], [0], [1], [0, 0, 1, 1], [], []>} : vector<8x52xbf16>, vector<52x128xbf16>, vector<8x128xf32> -> vector<8x128xf32>
    %c0_3 = arith.constant 0 : index
    %c0_4 = arith.constant 0 : index
    %4 = vector.load %arg4[%c0_3, %c0_4] : memref<1x128xf32, #tpu.memory_space<vmem>>, vector<1x128xf32>
    %5 = vector.broadcast %4 : vector<1x128xf32> to vector<8x128xf32>
    %6 = arith.addf %3, %5 : vector<8x128xf32>
    %cst_5 = arith.constant 0.000000e+00 : f32
    %7 = vector.broadcast %cst_5 : f32 to vector<8x128xf32>
    %8 = arith.cmpf oge, %6, %7 : vector<8x128xf32>
    %cst_6 = arith.constant 1.500000e-01 : f32
    %9 = vector.broadcast %cst_6 : f32 to vector<8x128xf32>
    %10 = arith.mulf %9, %6 : vector<8x128xf32>
    %11 = arith.select %8, %6, %10 : vector<8x128xi1>, vector<8x128xf32>
    %12 = arith.truncf %11 : vector<8x128xf32> to vector<8x128xbf16>
    %c0_7 = arith.constant 0 : index
    %c0_8 = arith.constant 0 : index
    %13 = vector.load %arg5[%c0_7, %c0_8] : memref<128x128xbf16, #tpu.memory_space<vmem>>, vector<128x128xbf16>
    %cst_9 = arith.constant dense<0.000000e+00> : vector<8x128xf32>
    %14 = tpu.matmul %12, %13, %cst_9 {dimension_numbers = #tpu.dot_dimension_numbers<[1], [0], [0], [1], [0, 0, 1, 1], [], []>} : vector<8x128xbf16>, vector<128x128xbf16>, vector<8x128xf32> -> vector<8x128xf32>
    %c0_10 = arith.constant 0 : index
    %c0_11 = arith.constant 0 : index
    %15 = vector.load %arg6[%c0_10, %c0_11] : memref<1x128xf32, #tpu.memory_space<vmem>>, vector<1x128xf32>
    %16 = vector.broadcast %15 : vector<1x128xf32> to vector<8x128xf32>
    %17 = arith.addf %14, %16 : vector<8x128xf32>
    %cst_12 = arith.constant 0.000000e+00 : f32
    %18 = vector.broadcast %cst_12 : f32 to vector<8x128xf32>
    %19 = arith.cmpf oge, %17, %18 : vector<8x128xf32>
    %cst_13 = arith.constant 1.500000e-01 : f32
    %20 = vector.broadcast %cst_13 : f32 to vector<8x128xf32>
    %21 = arith.mulf %20, %17 : vector<8x128xf32>
    %22 = arith.select %19, %17, %21 : vector<8x128xi1>, vector<8x128xf32>
    %23 = arith.truncf %22 : vector<8x128xf32> to vector<8x128xbf16>
    %c0_14 = arith.constant 0 : index
    %c0_15 = arith.constant 0 : index
    %24 = vector.load %arg7[%c0_14, %c0_15] : memref<128x128xbf16, #tpu.memory_space<vmem>>, vector<128x128xbf16>
    %cst_16 = arith.constant dense<0.000000e+00> : vector<8x128xf32>
    %25 = tpu.matmul %23, %24, %cst_16 {dimension_numbers = #tpu.dot_dimension_numbers<[1], [0], [0], [1], [0, 0, 1, 1], [], []>} : vector<8x128xbf16>, vector<128x128xbf16>, vector<8x128xf32> -> vector<8x128xf32>
    %c0_17 = arith.constant 0 : index
    %c0_18 = arith.constant 0 : index
    %26 = vector.load %arg8[%c0_17, %c0_18] : memref<1x128xf32, #tpu.memory_space<vmem>>, vector<1x128xf32>
    %27 = vector.broadcast %26 : vector<1x128xf32> to vector<8x128xf32>
    %28 = arith.addf %25, %27 : vector<8x128xf32>
    %cst_19 = arith.constant 0.000000e+00 : f32
    %29 = vector.broadcast %cst_19 : f32 to vector<8x128xf32>
    %30 = arith.cmpf oge, %28, %29 : vector<8x128xf32>
    %cst_20 = arith.constant 1.500000e-01 : f32
    %31 = vector.broadcast %cst_20 : f32 to vector<8x128xf32>
    %32 = arith.mulf %31, %28 : vector<8x128xf32>
    %33 = arith.select %30, %28, %32 : vector<8x128xi1>, vector<8x128xf32>
    %34 = arith.truncf %33 : vector<8x128xf32> to vector<8x128xbf16>
    %c0_21 = arith.constant 0 : index
    %c0_22 = arith.constant 0 : index
    %35 = vector.load %arg9[%c0_21, %c0_22] : memref<128x128xbf16, #tpu.memory_space<vmem>>, vector<128x128xbf16>
    %cst_23 = arith.constant dense<0.000000e+00> : vector<8x128xf32>
    %36 = tpu.matmul %34, %35, %cst_23 {dimension_numbers = #tpu.dot_dimension_numbers<[1], [0], [0], [1], [0, 0, 1, 1], [], []>} : vector<8x128xbf16>, vector<128x128xbf16>, vector<8x128xf32> -> vector<8x128xf32>
    %c0_24 = arith.constant 0 : index
    %c0_25 = arith.constant 0 : index
    %37 = vector.load %arg10[%c0_24, %c0_25] : memref<1x128xf32, #tpu.memory_space<vmem>>, vector<1x128xf32>
    %38 = vector.broadcast %37 : vector<1x128xf32> to vector<8x128xf32>
    %39 = arith.addf %36, %38 : vector<8x128xf32>
    %cst_26 = arith.constant 0.000000e+00 : f32
    %40 = vector.broadcast %cst_26 : f32 to vector<8x128xf32>
    %41 = arith.cmpf oge, %39, %40 : vector<8x128xf32>
    %cst_27 = arith.constant 1.500000e-01 : f32
    %42 = vector.broadcast %cst_27 : f32 to vector<8x128xf32>
    %43 = arith.mulf %42, %39 : vector<8x128xf32>
    %44 = arith.select %41, %39, %43 : vector<8x128xi1>, vector<8x128xf32>
    %45 = arith.truncf %44 : vector<8x128xf32> to vector<8x128xbf16>
    %c0_28 = arith.constant 0 : index
    %c0_29 = arith.constant 0 : index
    %46 = vector.load %arg11[%c0_28, %c0_29] : memref<128x128xbf16, #tpu.memory_space<vmem>>, vector<128x128xbf16>
    %cst_30 = arith.constant dense<0.000000e+00> : vector<8x128xf32>
    %47 = tpu.matmul %45, %46, %cst_30 {dimension_numbers = #tpu.dot_dimension_numbers<[1], [0], [0], [1], [0, 0, 1, 1], [], []>} : vector<8x128xbf16>, vector<128x128xbf16>, vector<8x128xf32> -> vector<8x128xf32>
    %c0_31 = arith.constant 0 : index
    %c0_32 = arith.constant 0 : index
    %48 = vector.load %arg12[%c0_31, %c0_32] : memref<1x128xf32, #tpu.memory_space<vmem>>, vector<1x128xf32>
    %49 = vector.broadcast %48 : vector<1x128xf32> to vector<8x128xf32>
    %50 = arith.addf %47, %49 : vector<8x128xf32>
    %cst_33 = arith.constant 0.000000e+00 : f32
    %51 = vector.broadcast %cst_33 : f32 to vector<8x128xf32>
    %52 = arith.cmpf oge, %50, %51 : vector<8x128xf32>
    %cst_34 = arith.constant 1.500000e-01 : f32
    %53 = vector.broadcast %cst_34 : f32 to vector<8x128xf32>
    %54 = arith.mulf %53, %50 : vector<8x128xf32>
    %55 = arith.select %52, %50, %54 : vector<8x128xi1>, vector<8x128xf32>
    %56 = arith.truncf %55 : vector<8x128xf32> to vector<8x128xbf16>
    %c0_35 = arith.constant 0 : index
    %c0_36 = arith.constant 0 : index
    %57 = vector.load %arg13[%c0_35, %c0_36] : memref<128x128xbf16, #tpu.memory_space<vmem>>, vector<128x128xbf16>
    %cst_37 = arith.constant dense<0.000000e+00> : vector<8x128xf32>
    %58 = tpu.matmul %56, %57, %cst_37 {dimension_numbers = #tpu.dot_dimension_numbers<[1], [0], [0], [1], [0, 0, 1, 1], [], []>} : vector<8x128xbf16>, vector<128x128xbf16>, vector<8x128xf32> -> vector<8x128xf32>
    %c0_38 = arith.constant 0 : index
    %c0_39 = arith.constant 0 : index
    %59 = vector.load %arg14[%c0_38, %c0_39] : memref<1x128xf32, #tpu.memory_space<vmem>>, vector<1x128xf32>
    %60 = vector.broadcast %59 : vector<1x128xf32> to vector<8x128xf32>
    %61 = arith.addf %58, %60 : vector<8x128xf32>
    %c0_40 = arith.constant 0 : index
    %c0_41 = arith.constant 0 : index
    %62 = vector.load %arg2[%c0_40, %c0_41] : memref<8x52xf32, #tpu.memory_space<vmem>>, vector<8x52xf32>
    %63 = arith.truncf %62 : vector<8x52xf32> to vector<8x52xbf16>
    %c0_42 = arith.constant 0 : index
    %c0_43 = arith.constant 0 : index
    %64 = vector.load %arg15[%c0_42, %c0_43] : memref<52x128xbf16, #tpu.memory_space<vmem>>, vector<52x128xbf16>
    %cst_44 = arith.constant dense<0.000000e+00> : vector<8x128xf32>
    %65 = tpu.matmul %63, %64, %cst_44 {dimension_numbers = #tpu.dot_dimension_numbers<[1], [0], [0], [1], [0, 0, 1, 1], [], []>} : vector<8x52xbf16>, vector<52x128xbf16>, vector<8x128xf32> -> vector<8x128xf32>
    %66 = arith.addf %61, %65 : vector<8x128xf32>
    %cst_45 = arith.constant 0.000000e+00 : f32
    %67 = vector.broadcast %cst_45 : f32 to vector<8x128xf32>
    %68 = arith.cmpf oge, %66, %67 : vector<8x128xf32>
    %cst_46 = arith.constant 1.500000e-01 : f32
    %69 = vector.broadcast %cst_46 : f32 to vector<8x128xf32>
    %70 = arith.mulf %69, %66 : vector<8x128xf32>
    %71 = arith.select %68, %66, %70 : vector<8x128xi1>, vector<8x128xf32>
    %72 = arith.truncf %71 : vector<8x128xf32> to vector<8x128xbf16>
    %c0_47 = arith.constant 0 : index
    %c0_48 = arith.constant 0 : index
    %73 = vector.load %arg16[%c0_47, %c0_48] : memref<128x128xbf16, #tpu.memory_space<vmem>>, vector<128x128xbf16>
    %cst_49 = arith.constant dense<0.000000e+00> : vector<8x128xf32>
    %74 = tpu.matmul %72, %73, %cst_49 {dimension_numbers = #tpu.dot_dimension_numbers<[1], [0], [0], [1], [0, 0, 1, 1], [], []>} : vector<8x128xbf16>, vector<128x128xbf16>, vector<8x128xf32> -> vector<8x128xf32>
    %c0_50 = arith.constant 0 : index
    %c0_51 = arith.constant 0 : index
    %75 = vector.load %arg17[%c0_50, %c0_51] : memref<1x128xf32, #tpu.memory_space<vmem>>, vector<1x128xf32>
    %76 = vector.broadcast %75 : vector<1x128xf32> to vector<8x128xf32>
    %77 = arith.addf %74, %76 : vector<8x128xf32>
    %c0_52 = arith.constant 0 : index
    %c0_53 = arith.constant 0 : index
    %78 = vector.load %arg18[%c0_52, %c0_53] : memref<8x128xf32, #tpu.memory_space<vmem>>, vector<8x128xf32>
    tpu.vector_store %arg18[%c0_52, %c0_53], %77 {strides = array<i32>} : memref<8x128xf32, #tpu.memory_space<vmem>>, vector<8x128xf32>,
    return
  }
  func.func @transform_0(%arg0: i32) -> (i32, i32) {
    %c0_i32 = arith.constant 0 : i32
    %c0_i32_0 = arith.constant 0 : i32
    return %arg0, %c0_i32 : i32, i32
  }
  func.func @transform_1(%arg0: i32) -> (i32, i32) {
    %c0_i32 = arith.constant 0 : i32
    %c0_i32_0 = arith.constant 0 : i32
    return %arg0, %c0_i32 : i32, i32
  }
  func.func @transform_2(%arg0: i32) -> (i32, i32) {
    %c0_i32 = arith.constant 0 : i32
    %c0_i32_0 = arith.constant 0 : i32
    %c0_i32_1 = arith.constant 0 : i32
    return %c0_i32, %c0_i32_0 : i32, i32
  }
  func.func @transform_3(%arg0: i32) -> (i32, i32) {
    %c0_i32 = arith.constant 0 : i32
    %c0_i32_0 = arith.constant 0 : i32
    %c0_i32_1 = arith.constant 0 : i32
    return %c0_i32, %c0_i32_0 : i32, i32
  }
  func.func @transform_4(%arg0: i32) -> (i32, i32) {
    %c0_i32 = arith.constant 0 : i32
    %c0_i32_0 = arith.constant 0 : i32
    %c0_i32_1 = arith.constant 0 : i32
    return %c0_i32, %c0_i32_0 : i32, i32
  }
  func.func @transform_5(%arg0: i32) -> (i32, i32) {
    %c0_i32 = arith.constant 0 : i32
    %c0_i32_0 = arith.constant 0 : i32
    %c0_i32_1 = arith.constant 0 : i32
    return %c0_i32, %c0_i32_0 : i32, i32
  }
  func.func @transform_6(%arg0: i32) -> (i32, i32) {
    %c0_i32 = arith.constant 0 : i32
    %c0_i32_0 = arith.constant 0 : i32
    %c0_i32_1 = arith.constant 0 : i32
    return %c0_i32, %c0_i32_0 : i32, i32
  }
  func.func @transform_7(%arg0: i32) -> (i32, i32) {
    %c0_i32 = arith.constant 0 : i32
    %c0_i32_0 = arith.constant 0 : i32
    %c0_i32_1 = arith.constant 0 : i32
    return %c0_i32, %c0_i32_0 : i32, i32
  }
  func.func @transform_8(%arg0: i32) -> (i32, i32) {
    %c0_i32 = arith.constant 0 : i32
    %c0_i32_0 = arith.constant 0 : i32
    %c0_i32_1 = arith.constant 0 : i32
    return %c0_i32, %c0_i32_0 : i32, i32
  }
  func.func @transform_9(%arg0: i32) -> (i32, i32) {
    %c0_i32 = arith.constant 0 : i32
    %c0_i32_0 = arith.constant 0 : i32
    %c0_i32_1 = arith.constant 0 : i32
    return %c0_i32, %c0_i32_0 : i32, i32
  }
  func.func @transform_10(%arg0: i32) -> (i32, i32) {
    %c0_i32 = arith.constant 0 : i32
    %c0_i32_0 = arith.constant 0 : i32
    %c0_i32_1 = arith.constant 0 : i32
    return %c0_i32, %c0_i32_0 : i32, i32
  }
  func.func @transform_11(%arg0: i32) -> (i32, i32) {
    %c0_i32 = arith.constant 0 : i32
    %c0_i32_0 = arith.constant 0 : i32
    %c0_i32_1 = arith.constant 0 : i32
    return %c0_i32, %c0_i32_0 : i32, i32
  }
  func.func @transform_12(%arg0: i32) -> (i32, i32) {
    %c0_i32 = arith.constant 0 : i32
    %c0_i32_0 = arith.constant 0 : i32
    %c0_i32_1 = arith.constant 0 : i32
    return %c0_i32, %c0_i32_0 : i32, i32
  }
  func.func @transform_13(%arg0: i32) -> (i32, i32) {
    %c0_i32 = arith.constant 0 : i32
    %c0_i32_0 = arith.constant 0 : i32
    %c0_i32_1 = arith.constant 0 : i32
    return %c0_i32, %c0_i32_0 : i32, i32
  }
  func.func @transform_14(%arg0: i32) -> (i32, i32) {
    %c0_i32 = arith.constant 0 : i32
    %c0_i32_0 = arith.constant 0 : i32
    %c0_i32_1 = arith.constant 0 : i32
    return %c0_i32, %c0_i32_0 : i32, i32
  }
  func.func @transform_15(%arg0: i32) -> (i32, i32) {
    %c0_i32 = arith.constant 0 : i32
    %c0_i32_0 = arith.constant 0 : i32
    %c0_i32_1 = arith.constant 0 : i32
    return %c0_i32, %c0_i32_0 : i32, i32
  }
  func.func @transform_16(%arg0: i32) -> (i32, i32) {
    %c0_i32 = arith.constant 0 : i32
    %c0_i32_0 = arith.constant 0 : i32
    %c0_i32_1 = arith.constant 0 : i32
    return %c0_i32, %c0_i32_0 : i32, i32
  }
  func.func @transform_17(%arg0: i32) -> (i32, i32) {
    %c0_i32 = arith.constant 0 : i32
    %c0_i32_0 = arith.constant 0 : i32
    return %arg0, %c0_i32 : i32, i32
  }
}

</mosaic_0001>

<llo_original>
// kernel: tpu_custom_call.1
$region0: #{tpu_custom_call.1}
  #allocation0 [shape = 'u32[]', space=smem, size = 0x4, offset = 0x4, fixed_abs, tag = 'smem constant byte address 0x4 - core index']
  #allocation1 [shape = 'u32[72,128]{1,0:T(1,128)}', space=vmem, size = 0x9000, scoped, tag = 'internal scratch']
  %s0 = inlined_call_operand.hbm [shape: f32[16,52], index: 0, kind: input, shape index: {}]
  %s1 = inlined_call_operand.hbm [shape: f32[16,52], index: 1, kind: input, shape index: {}]
  %s2 = inlined_call_operand.hbm [shape: bf16[52,128], index: 2, kind: input, shape index: {}]
  %s3 = inlined_call_operand.vmem [shape: f32[1,128], index: 3, kind: input, shape index: {}]
  %s4 = inlined_call_operand.hbm [shape: bf16[128,128], index: 4, kind: input, shape index: {}]
  %s5 = inlined_call_operand.vmem [shape: f32[1,128], index: 5, kind: input, shape index: {}]
  %s6 = inlined_call_operand.hbm [shape: bf16[128,128], index: 6, kind: input, shape index: {}]
  %s7 = inlined_call_operand.vmem [shape: f32[1,128], index: 7, kind: input, shape index: {}]
  %s8 = inlined_call_operand.hbm [shape: bf16[128,128], index: 8, kind: input, shape index: {}]
  %s9 = inlined_call_operand.vmem [shape: f32[1,128], index: 9, kind: input, shape index: {}]
  %s10 = inlined_call_operand.hbm [shape: bf16[128,128], index: 10, kind: input, shape index: {}]
  %s11 = inlined_call_operand.vmem [shape: f32[1,128], index: 11, kind: input, shape index: {}]
  %s12 = inlined_call_operand.hbm [shape: bf16[128,128], index: 12, kind: input, shape index: {}]
  %s13 = inlined_call_operand.vmem [shape: f32[1,128], index: 13, kind: input, shape index: {}]
  %s14 = inlined_call_operand.hbm [shape: bf16[52,128], index: 14, kind: input, shape index: {}]
  %s15 = inlined_call_operand.hbm [shape: bf16[128,128], index: 15, kind: input, shape index: {}]
  %s16 = inlined_call_operand.vmem [shape: f32[1,128], index: 16, kind: input, shape index: {}]
  %s17 = inlined_call_operand.hbm [shape: f32[16,128], index: 17, kind: output, shape index: {}]
  %s18 = sld [smem:[#allocation0]]
  $region141: #{tpu_custom_call.1} parent=0
    _
  %s20 = ssub.s32 1, %s18
  %s21 = scalar_select 0, %s20, %s18
  $region1: #{tpu_custom_call.1} parent=0
    #allocation2 [shape = 'u8[8192]{0}', space=vmem, size = 0x2000, scoped, tag = 'input window, operand 0']
    #allocation3 [shape = 's32[2]{0}', space=sflag, size = 0x8, scoped, tag = 'scoped memory for tpu_custom_call.1']
    #allocation4 [shape = 's32[2]{0}', space=sflag, size = 0x8, scoped, tag = 'scoped memory for tpu_custom_call.1']
    #allocation5 [shape = 'u8[8192]{0}', space=vmem, size = 0x2000, scoped, tag = 'input window, operand 1']
    #allocation6 [shape = 's32[2]{0}', space=sflag, size = 0x8, scoped, tag = 'scoped memory for tpu_custom_call.1']
    #allocation7 [shape = 'u8[14336]{0}', space=vmem, size = 0x3800, scoped, tag = 'input window, operand 2, single buffered']
    #allocation8 [shape = 'u8[32768]{0}', space=vmem, size = 0x8000, scoped, tag = 'input window, operand 4, single buffered']
    #allocation9 [shape = 's32[1]{0}', space=sflag, size = 0x4, scoped, tag = 'scoped memory for tpu_custom_call.1']
    #allocation10 [shape = 'u8[32768]{0}', space=vmem, size = 0x8000, scoped, tag = 'input window, operand 6, single buffered']
    #allocation11 [shape = 'u8[32768]{0}', space=vmem, size = 0x8000, scoped, tag = 'input window, operand 8, single buffered']
    #allocation12 [shape = 's32[1]{0}', space=sflag, size = 0x4, scoped, tag = 'scoped memory for tpu_custom_call.1']
    #allocation13 [shape = 'u8[32768]{0}', space=vmem, size = 0x8000, scoped, tag = 'input window, operand 10, single buffered']
    #allocation14 [shape = 'u8[32768]{0}', space=vmem, size = 0x8000, scoped, tag = 'input window, operand 12, single buffered']
    #allocation15 [shape = 's32[1]{0}', space=sflag, size = 0x4, scoped, tag = 'scoped memory for tpu_custom_call.1']
    #allocation16 [shape = 'u8[14336]{0}', space=vmem, size = 0x3800, scoped, tag = 'input window, operand 14, single buffered']
    #allocation17 [shape = 'u8[32768]{0}', space=vmem, size = 0x8000, scoped, tag = 'input window, operand 15, single buffered']
    #allocation18 [shape = 's32[1]{0}', space=sflag, size = 0x4, scoped, tag = 'scoped memory for tpu_custom_call.1']
    #allocation19 [shape = 'u8[8192]{0}', space=vmem, size = 0x2000, scoped, tag = 'output window, operand 0']
    %22 = vsyncpa [#allocation3], 0
    %s23 = scalar_lea.sflag [#allocation3], 1
    %24 = vsyncpa %s23, 0
    %25 = vsyncpa [#allocation6], 0
    %s26 = scalar_lea.sflag [#allocation6], 1
    %27 = vsyncpa %s26, 0
    %28 = vsyncpa [#allocation9], 0
    %29 = vsyncpa [#allocation12], 0
    %30 = vsyncpa [#allocation15], 0
    %31 = vsyncpa [#allocation18], 0
    %32 = vsyncpa [#allocation4], 0
    %s33 = scalar_lea.sflag [#allocation4], 1
    %34 = vsyncpa %s33, 0
    loop: start=0, step=1, limit=4
    $region2: #{tpu_custom_call.1} parent=1 // loop_pre_header
      _
    $region3: #{tpu_custom_call.1} parent=1 // loop_header
      %s36 = sphi 0, %s40
      %p37 = scmp.ge.s32.totalorder %s36, 4
      %s46 = sphi 0, %s48
      %s49 = sphi 0, %s46
      %s50 = sphi 0, %s49
      %s66 = sphi 0, %s50
      %s72 = sphi 0, %s74
      %s75 = sphi 0, %s72
      %s76 = sphi 0, %s75
      %s92 = sphi 0, %s76
      %s96 = sphi 0, %s96
      %s98 = sphi 0, %s96
      %s99 = sphi 0, %s98
      %s113 = sphi 0, %s99
      %s117 = sphi 0, %s117
      %s119 = sphi 0, %s117
      %s120 = sphi 0, %s119
      %s134 = sphi 0, %s120
      %s138 = sphi 0, %s138
      %s140 = sphi 0, %s138
      %s141 = sphi 0, %s140
      %s155 = sphi 0, %s141
      %s159 = sphi 0, %s159
      %s161 = sphi 0, %s159
      %s162 = sphi 0, %s161
      %s176 = sphi 0, %s162
      %s180 = sphi 0, %s180
      %s182 = sphi 0, %s180
      %s183 = sphi 0, %s182
      %s197 = sphi 0, %s183
      %s201 = sphi 0, %s201
      %s203 = sphi 0, %s201
      %s204 = sphi 0, %s203
      %s218 = sphi 0, %s204
      %s222 = sphi 0, %s222
      %s224 = sphi 0, %s222
      %s225 = sphi 0, %s224
      %s239 = sphi 0, %s225
      %s243 = sphi 0, %s243
      %s245 = sphi 0, %s243
      %s246 = sphi 0, %s245
      %s260 = sphi 0, %s246
      %s264 = sphi 0, %s264
      %s266 = sphi 0, %s264
      %s267 = sphi 0, %s266
      %s281 = sphi 0, %s267
      %s285 = sphi 0, %s285
      %s287 = sphi 0, %s285
      %s288 = sphi 0, %s287
      %s302 = sphi 0, %s288
      %s306 = sphi 0, %s306
      %s308 = sphi 0, %s306
      %s309 = sphi 0, %s308
      %s323 = sphi 0, %s309
      %s327 = sphi 0, %s327
      %s329 = sphi 0, %s327
      %s330 = sphi 0, %s329
      %s344 = sphi 0, %s330
      %s348 = sphi 0, %s348
      %s350 = sphi 0, %s348
      %s351 = sphi 0, %s350
      %s365 = sphi 0, %s351
      %s369 = sphi 0, %s369
      %s371 = sphi 0, %s369
      %s372 = sphi 0, %s371
      %s386 = sphi 0, %s372
      %s390 = sphi 0, %s390
      %s392 = sphi 0, %s390
      %s393 = sphi 0, %s392
      %s407 = sphi 0, %s393
      %s413 = sphi 0, %s415
      %s416 = sphi 0, %s413
      %s417 = sphi 0, %s416
      %s433 = sphi 0, %s417
    $region4: #{tpu_custom_call.1} parent=1 // loop_header_branch
      %39 = sbr.rel (%p37) target = $region8
    $region5: #{tpu_custom_call.1} parent=1 // loop_body
      %s41 = ssub.s32 %s36, 1
      %s42 = ssub.s32 %s36, 2
      %s43 = sadd.s32 %s36, 1
      %s44 = ssub.s32 %s36, %s43
      %p45 = scmp.eq.s32.totalorder %s44, 0
      %s47 = sadd.s32 %s46, 1
      %s48 = scalar_select %p45, %s46, %s47
      %p51 = pneg %p45
      %p52 = scmp.eq.s32.totalorder %s36, 1
      %p53 = por %p51, %p52
      %p54 = scmp.ne.s32.totalorder %s46, %s49
      %p55 = scmp.eq.s32.totalorder %s36, 0
      %p56 = por %p54, %p55
      %p57 = scmp.ne.s32.totalorder %s46, %s49
      %p58 = scmp.eq.s32.totalorder %s41, 1
      %p59 = por %p57, %p58
      %p60 = scmp.ne.s32.totalorder %s49, %s50
      %p61 = scmp.eq.s32.totalorder %s41, 0
      %p62 = por %p60, %p61
      %p63 = scmp.ne.s32.totalorder %s49, %s50
      %p64 = scmp.eq.s32.totalorder %s42, 1
      %p65 = por %p63, %p64
      %p67 = scmp.ne.s32.totalorder %s50, %s66
      %p68 = scmp.eq.s32.totalorder %s42, 0
      %p69 = por %p67, %p68
      %s70 = ssub.s32 %s36, %s43
      %p71 = scmp.eq.s32.totalorder %s70, 0
      %s73 = sadd.s32 %s72, 1
      %s74 = scalar_select %p71, %s72, %s73
      %p77 = pneg %p71
      %p78 = scmp.eq.s32.totalorder %s36, 1
      %p79 = por %p77, %p78
      %p80 = scmp.ne.s32.totalorder %s72, %s75
      %p81 = scmp.eq.s32.totalorder %s36, 0
      %p82 = por %p80, %p81
      %p83 = scmp.ne.s32.totalorder %s72, %s75
      %p84 = scmp.eq.s32.totalorder %s41, 1
      %p85 = por %p83, %p84
      %p86 = scmp.ne.s32.totalorder %s75, %s76
      %p87 = scmp.eq.s32.totalorder %s41, 0
      %p88 = por %p86, %p87
      %p89 = scmp.ne.s32.totalorder %s75, %s76
      %p90 = scmp.eq.s32.totalorder %s42, 1
      %p91 = por %p89, %p90
      %p93 = scmp.ne.s32.totalorder %s76, %s92
      %p94 = scmp.eq.s32.totalorder %s42, 0
      %p95 = por %p93, %p94
      %s97 = sadd.s32 %s96, 1
      %p100 = scmp.eq.s32.totalorder %s36, 1
      %p101 = scmp.ne.s32.totalorder %s96, %s98
      %p102 = scmp.eq.s32.totalorder %s36, 0
      %p103 = por %p101, %p102
      %p104 = scmp.ne.s32.totalorder %s96, %s98
      %p105 = scmp.eq.s32.totalorder %s41, 1
      %p106 = por %p104, %p105
      %p107 = scmp.ne.s32.totalorder %s98, %s99
      %p108 = scmp.eq.s32.totalorder %s41, 0
      %p109 = por %p107, %p108
      %p110 = scmp.ne.s32.totalorder %s98, %s99
      %p111 = scmp.eq.s32.totalorder %s42, 1
      %p112 = por %p110, %p111
      %p114 = scmp.ne.s32.totalorder %s99, %s113
      %p115 = scmp.eq.s32.totalorder %s42, 0
      %p116 = por %p114, %p115
      %s118 = sadd.s32 %s117, 1
      %p121 = scmp.eq.s32.totalorder %s36, 1
      %p122 = scmp.ne.s32.totalorder %s117, %s119
      %p123 = scmp.eq.s32.totalorder %s36, 0
      %p124 = por %p122, %p123
      %p125 = scmp.ne.s32.totalorder %s117, %s119
      %p126 = scmp.eq.s32.totalorder %s41, 1
      %p127 = por %p125, %p126
      %p128 = scmp.ne.s32.totalorder %s119, %s120
      %p129 = scmp.eq.s32.totalorder %s41, 0
      %p130 = por %p128, %p129
      %p131 = scmp.ne.s32.totalorder %s119, %s120
      %p132 = scmp.eq.s32.totalorder %s42, 1
      %p133 = por %p131, %p132
      %p135 = scmp.ne.s32.totalorder %s120, %s134
      %p136 = scmp.eq.s32.totalorder %s42, 0
      %p137 = por %p135, %p136
      %s139 = sadd.s32 %s138, 1
      %p142 = scmp.eq.s32.totalorder %s36, 1
      %p143 = scmp.ne.s32.totalorder %s138, %s140
      %p144 = scmp.eq.s32.totalorder %s36, 0
      %p145 = por %p143, %p144
      %p146 = scmp.ne.s32.totalorder %s138, %s140
      %p147 = scmp.eq.s32.totalorder %s41, 1
      %p148 = por %p146, %p147
      %p149 = scmp.ne.s32.totalorder %s140, %s141
      %p150 = scmp.eq.s32.totalorder %s41, 0
      %p151 = por %p149, %p150
      %p152 = scmp.ne.s32.totalorder %s140, %s141
      %p153 = scmp.eq.s32.totalorder %s42, 1
      %p154 = por %p152, %p153
      %p156 = scmp.ne.s32.totalorder %s141, %s155
      %p157 = scmp.eq.s32.totalorder %s42, 0
      %p158 = por %p156, %p157
      %s160 = sadd.s32 %s159, 1
      %p163 = scmp.eq.s32.totalorder %s36, 1
      %p164 = scmp.ne.s32.totalorder %s159, %s161
      %p165 = scmp.eq.s32.totalorder %s36, 0
      %p166 = por %p164, %p165
      %p167 = scmp.ne.s32.totalorder %s159, %s161
      %p168 = scmp.eq.s32.totalorder %s41, 1
      %p169 = por %p167, %p168
      %p170 = scmp.ne.s32.totalorder %s161, %s162
      %p171 = scmp.eq.s32.totalorder %s41, 0
      %p172 = por %p170, %p171
      %p173 = scmp.ne.s32.totalorder %s161, %s162
      %p174 = scmp.eq.s32.totalorder %s42, 1
      %p175 = por %p173, %p174
      %p177 = scmp.ne.s32.totalorder %s162, %s176
      %p178 = scmp.eq.s32.totalorder %s42, 0
      %p179 = por %p177, %p178
      %s181 = sadd.s32 %s180, 1
      %p184 = scmp.eq.s32.totalorder %s36, 1
      %p185 = scmp.ne.s32.totalorder %s180, %s182
      %p186 = scmp.eq.s32.totalorder %s36, 0
      %p187 = por %p185, %p186
      %p188 = scmp.ne.s32.totalorder %s180, %s182
      %p189 = scmp.eq.s32.totalorder %s41, 1
      %p190 = por %p188, %p189
      %p191 = scmp.ne.s32.totalorder %s182, %s183
      %p192 = scmp.eq.s32.totalorder %s41, 0
      %p193 = por %p191, %p192
      %p194 = scmp.ne.s32.totalorder %s182, %s183
      %p195 = scmp.eq.s32.totalorder %s42, 1
      %p196 = por %p194, %p195
      %p198 = scmp.ne.s32.totalorder %s183, %s197
      %p199 = scmp.eq.s32.totalorder %s42, 0
      %p200 = por %p198, %p199
      %s202 = sadd.s32 %s201, 1
      %p205 = scmp.eq.s32.totalorder %s36, 1
      %p206 = scmp.ne.s32.totalorder %s201, %s203
      %p207 = scmp.eq.s32.totalorder %s36, 0
      %p208 = por %p206, %p207
      %p209 = scmp.ne.s32.totalorder %s201, %s203
      %p210 = scmp.eq.s32.totalorder %s41, 1
      %p211 = por %p209, %p210
      %p212 = scmp.ne.s32.totalorder %s203, %s204
      %p213 = scmp.eq.s32.totalorder %s41, 0
      %p214 = por %p212, %p213
      %p215 = scmp.ne.s32.totalorder %s203, %s204
      %p216 = scmp.eq.s32.totalorder %s42, 1
      %p217 = por %p215, %p216
      %p219 = scmp.ne.s32.totalorder %s204, %s218
      %p220 = scmp.eq.s32.totalorder %s42, 0
      %p221 = por %p219, %p220
      %s223 = sadd.s32 %s222, 1
      %p226 = scmp.eq.s32.totalorder %s36, 1
      %p227 = scmp.ne.s32.totalorder %s222, %s224
      %p228 = scmp.eq.s32.totalorder %s36, 0
      %p229 = por %p227, %p228
      %p230 = scmp.ne.s32.totalorder %s222, %s224
      %p231 = scmp.eq.s32.totalorder %s41, 1
      %p232 = por %p230, %p231
      %p233 = scmp.ne.s32.totalorder %s224, %s225
      %p234 = scmp.eq.s32.totalorder %s41, 0
      %p235 = por %p233, %p234
      %p236 = scmp.ne.s32.totalorder %s224, %s225
      %p237 = scmp.eq.s32.totalorder %s42, 1
      %p238 = por %p236, %p237
      %p240 = scmp.ne.s32.totalorder %s225, %s239
      %p241 = scmp.eq.s32.totalorder %s42, 0
      %p242 = por %p240, %p241
      %s244 = sadd.s32 %s243, 1
      %p247 = scmp.eq.s32.totalorder %s36, 1
      %p248 = scmp.ne.s32.totalorder %s243, %s245
      %p249 = scmp.eq.s32.totalorder %s36, 0
      %p250 = por %p248, %p249
      %p251 = scmp.ne.s32.totalorder %s243, %s245
      %p252 = scmp.eq.s32.totalorder %s41, 1
      %p253 = por %p251, %p252
      %p254 = scmp.ne.s32.totalorder %s245, %s246
      %p255 = scmp.eq.s32.totalorder %s41, 0
      %p256 = por %p254, %p255
      %p257 = scmp.ne.s32.totalorder %s245, %s246
      %p258 = scmp.eq.s32.totalorder %s42, 1
      %p259 = por %p257, %p258
      %p261 = scmp.ne.s32.totalorder %s246, %s260
      %p262 = scmp.eq.s32.totalorder %s42, 0
      %p263 = por %p261, %p262
      %s265 = sadd.s32 %s264, 1
      %p268 = scmp.eq.s32.totalorder %s36, 1
      %p269 = scmp.ne.s32.totalorder %s264, %s266
      %p270 = scmp.eq.s32.totalorder %s36, 0
      %p271 = por %p269, %p270
      %p272 = scmp.ne.s32.totalorder %s264, %s266
      %p273 = scmp.eq.s32.totalorder %s41, 1
      %p274 = por %p272, %p273
      %p275 = scmp.ne.s32.totalorder %s266, %s267
      %p276 = scmp.eq.s32.totalorder %s41, 0
      %p277 = por %p275, %p276
      %p278 = scmp.ne.s32.totalorder %s266, %s267
      %p279 = scmp.eq.s32.totalorder %s42, 1
      %p280 = por %p278, %p279
      %p282 = scmp.ne.s32.totalorder %s267, %s281
      %p283 = scmp.eq.s32.totalorder %s42, 0
      %p284 = por %p282, %p283
      %s286 = sadd.s32 %s285, 1
      %p289 = scmp.eq.s32.totalorder %s36, 1
      %p290 = scmp.ne.s32.totalorder %s285, %s287
      %p291 = scmp.eq.s32.totalorder %s36, 0
      %p292 = por %p290, %p291
      %p293 = scmp.ne.s32.totalorder %s285, %s287
      %p294 = scmp.eq.s32.totalorder %s41, 1
      %p295 = por %p293, %p294
      %p296 = scmp.ne.s32.totalorder %s287, %s288
      %p297 = scmp.eq.s32.totalorder %s41, 0
      %p298 = por %p296, %p297
      %p299 = scmp.ne.s32.totalorder %s287, %s288
      %p300 = scmp.eq.s32.totalorder %s42, 1
      %p301 = por %p299, %p300
      %p303 = scmp.ne.s32.totalorder %s288, %s302
      %p304 = scmp.eq.s32.totalorder %s42, 0
      %p305 = por %p303, %p304
      %s307 = sadd.s32 %s306, 1
      %p310 = scmp.eq.s32.totalorder %s36, 1
      %p311 = scmp.ne.s32.totalorder %s306, %s308
      %p312 = scmp.eq.s32.totalorder %s36, 0
      %p313 = por %p311, %p312
      %p314 = scmp.ne.s32.totalorder %s306, %s308
      %p315 = scmp.eq.s32.totalorder %s41, 1
      %p316 = por %p314, %p315
      %p317 = scmp.ne.s32.totalorder %s308, %s309
      %p318 = scmp.eq.s32.totalorder %s41, 0
      %p319 = por %p317, %p318
      %p320 = scmp.ne.s32.totalorder %s308, %s309
      %p321 = scmp.eq.s32.totalorder %s42, 1
      %p322 = por %p320, %p321
      %p324 = scmp.ne.s32.totalorder %s309, %s323
      %p325 = scmp.eq.s32.totalorder %s42, 0
      %p326 = por %p324, %p325
      %s328 = sadd.s32 %s327, 1
      %p331 = scmp.eq.s32.totalorder %s36, 1
      %p332 = scmp.ne.s32.totalorder %s327, %s329
      %p333 = scmp.eq.s32.totalorder %s36, 0
      %p334 = por %p332, %p333
      %p335 = scmp.ne.s32.totalorder %s327, %s329
      %p336 = scmp.eq.s32.totalorder %s41, 1
      %p337 = por %p335, %p336
      %p338 = scmp.ne.s32.totalorder %s329, %s330
      %p339 = scmp.eq.s32.totalorder %s41, 0
      %p340 = por %p338, %p339
      %p341 = scmp.ne.s32.totalorder %s329, %s330
      %p342 = scmp.eq.s32.totalorder %s42, 1
      %p343 = por %p341, %p342
      %p345 = scmp.ne.s32.totalorder %s330, %s344
      %p346 = scmp.eq.s32.totalorder %s42, 0
      %p347 = por %p345, %p346
      %s349 = sadd.s32 %s348, 1
      %p352 = scmp.eq.s32.totalorder %s36, 1
      %p353 = scmp.ne.s32.totalorder %s348, %s350
      %p354 = scmp.eq.s32.totalorder %s36, 0
      %p355 = por %p353, %p354
      %p356 = scmp.ne.s32.totalorder %s348, %s350
      %p357 = scmp.eq.s32.totalorder %s41, 1
      %p358 = por %p356, %p357
      %p359 = scmp.ne.s32.totalorder %s350, %s351
      %p360 = scmp.eq.s32.totalorder %s41, 0
      %p361 = por %p359, %p360
      %p362 = scmp.ne.s32.totalorder %s350, %s351
      %p363 = scmp.eq.s32.totalorder %s42, 1
      %p364 = por %p362, %p363
      %p366 = scmp.ne.s32.totalorder %s351, %s365
      %p367 = scmp.eq.s32.totalorder %s42, 0
      %p368 = por %p366, %p367
      %s370 = sadd.s32 %s369, 1
      %p373 = scmp.eq.s32.totalorder %s36, 1
      %p374 = scmp.ne.s32.totalorder %s369, %s371
      %p375 = scmp.eq.s32.totalorder %s36, 0
      %p376 = por %p374, %p375
      %p377 = scmp.ne.s32.totalorder %s369, %s371
      %p378 = scmp.eq.s32.totalorder %s41, 1
      %p379 = por %p377, %p378
      %p380 = scmp.ne.s32.totalorder %s371, %s372
      %p381 = scmp.eq.s32.totalorder %s41, 0
      %p382 = por %p380, %p381
      %p383 = scmp.ne.s32.totalorder %s371, %s372
      %p384 = scmp.eq.s32.totalorder %s42, 1
      %p385 = por %p383, %p384
      %p387 = scmp.ne.s32.totalorder %s372, %s386
      %p388 = scmp.eq.s32.totalorder %s42, 0
      %p389 = por %p387, %p388
      %s391 = sadd.s32 %s390, 1
      %p394 = scmp.eq.s32.totalorder %s36, 1
      %p395 = scmp.ne.s32.totalorder %s390, %s392
      %p396 = scmp.eq.s32.totalorder %s36, 0
      %p397 = por %p395, %p396
      %p398 = scmp.ne.s32.totalorder %s390, %s392
      %p399 = scmp.eq.s32.totalorder %s41, 1
      %p400 = por %p398, %p399
      %p401 = scmp.ne.s32.totalorder %s392, %s393
      %p402 = scmp.eq.s32.totalorder %s41, 0
      %p403 = por %p401, %p402
      %p404 = scmp.ne.s32.totalorder %s392, %s393
      %p405 = scmp.eq.s32.totalorder %s42, 1
      %p406 = por %p404, %p405
      %p408 = scmp.ne.s32.totalorder %s393, %s407
      %p409 = scmp.eq.s32.totalorder %s42, 0
      %p410 = por %p408, %p409
      %s411 = ssub.s32 %s36, %s43
      %p412 = scmp.eq.s32.totalorder %s411, 0
      %s414 = sadd.s32 %s413, 1
      %s415 = scalar_select %p412, %s413, %s414
      %p418 = pneg %p412
      %p419 = scmp.eq.s32.totalorder %s36, 1
      %p420 = por %p418, %p419
      %p421 = scmp.ne.s32.totalorder %s413, %s416
      %p422 = scmp.eq.s32.totalorder %s36, 0
      %p423 = por %p421, %p422
      %p424 = scmp.ne.s32.totalorder %s413, %s416
      %p425 = scmp.eq.s32.totalorder %s41, 1
      %p426 = por %p424, %p425
      %p427 = scmp.ne.s32.totalorder %s416, %s417
      %p428 = scmp.eq.s32.totalorder %s41, 0
      %p429 = por %p427, %p428
      %p430 = scmp.ne.s32.totalorder %s416, %s417
      %p431 = scmp.eq.s32.totalorder %s42, 1
      %p432 = por %p430, %p431
      %p434 = scmp.ne.s32.totalorder %s417, %s433
      %p435 = scmp.eq.s32.totalorder %s42, 0
      %p436 = por %p434, %p435
      %p437 = scmp.le.s32.totalorder 1, %s36
      %p438 = scmp.lt.s32.totalorder %s36, 3
      %p439 = pnand %p437, %p438
      %p440 = pneg %p439
      // Predicated region
      $region9: #{tpu_custom_call.1} parent=5 // pred_check
        _
      $region10: #{tpu_custom_call.1} parent=5 // pred_check_branch
        %442 = sbr.rel (%p439) target = $region12
      $region11: #{tpu_custom_call.1} parent=5 // pred_region
        %s443 = ssub.s32 %s36, 1
        // Predicated region
        $region13: #{tpu_custom_call.1} parent=11 // pred_check
          %p444 = pneg %p109
        $region14: #{tpu_custom_call.1} parent=11 // pred_check_branch
          %446 = sbr.rel (%p444) target = $region16
        $region15: #{tpu_custom_call.1} parent=11 // pred_region
          %448 = vsyncadd [#allocation6], 0
          %s449 = sshll.u32 %s2, 4
          %s450 = int_to_ptr.hbm [resolvable:$true] %s449
          %s451 = sshll.u32 [#allocation7], 4
          %s452 = int_to_ptr.vmem [resolvable:$true] %s451
          %457 = dma.hbm_to_vmem [thread:$0]  %s450, 448, %s452, [#allocation6], 64, 64, 4
        $region16: #{tpu_custom_call.1} parent=11 // pred_fallthru
          _
        // Predicated region
        $region17: #{tpu_custom_call.1} parent=11 // pred_check
          %p458 = pneg %p130
        $region18: #{tpu_custom_call.1} parent=11 // pred_check_branch
          %460 = sbr.rel (%p458) target = $region20
        $region19: #{tpu_custom_call.1} parent=11 // pred_region
          _
        $region20: #{tpu_custom_call.1} parent=11 // pred_fallthru
          _
        // Predicated region
        $region21: #{tpu_custom_call.1} parent=11 // pred_check
          %p461 = pneg %p151
        $region22: #{tpu_custom_call.1} parent=11 // pred_check_branch
          %463 = sbr.rel (%p461) target = $region24
        $region23: #{tpu_custom_call.1} parent=11 // pred_region
          %465 = vsyncadd [#allocation9], 0
          %s466 = sshll.u32 %s4, 4
          %s467 = int_to_ptr.hbm [resolvable:$true] %s466
          %s468 = sshll.u32 [#allocation8], 4
          %s469 = int_to_ptr.vmem [resolvable:$true] %s468
          %474 = dma.hbm_to_vmem [thread:$0]  %s467, 1024, %s469, [#allocation9], 64, 64, 4
        $region24: #{tpu_custom_call.1} parent=11 // pred_fallthru
          _
        // Predicated region
        $region25: #{tpu_custom_call.1} parent=11 // pred_check
          %p475 = pneg %p172
        $region26: #{tpu_custom_call.1} parent=11 // pred_check_branch
          %477 = sbr.rel (%p475) target = $region28
        $region27: #{tpu_custom_call.1} parent=11 // pred_region
          _
        $region28: #{tpu_custom_call.1} parent=11 // pred_fallthru
          _
        // Predicated region
        $region29: #{tpu_custom_call.1} parent=11 // pred_check
          %p478 = pneg %p193
        $region30: #{tpu_custom_call.1} parent=11 // pred_check_branch
          %480 = sbr.rel (%p478) target = $region32
        $region31: #{tpu_custom_call.1} parent=11 // pred_region
          %482 = vsyncadd [#allocation9], 0
          %s483 = sshll.u32 %s6, 4
          %s484 = int_to_ptr.hbm [resolvable:$true] %s483
          %s485 = sshll.u32 [#allocation10], 4
          %s486 = int_to_ptr.vmem [resolvable:$true] %s485
          %491 = dma.hbm_to_vmem [thread:$0]  %s484, 1024, %s486, [#allocation9], 64, 64, 4
        $region32: #{tpu_custom_call.1} parent=11 // pred_fallthru
          _
        // Predicated region
        $region33: #{tpu_custom_call.1} parent=11 // pred_check
          %p492 = pneg %p214
        $region34: #{tpu_custom_call.1} parent=11 // pred_check_branch
          %494 = sbr.rel (%p492) target = $region36
        $region35: #{tpu_custom_call.1} parent=11 // pred_region
          _
        $region36: #{tpu_custom_call.1} parent=11 // pred_fallthru
          _
        // Predicated region
        $region37: #{tpu_custom_call.1} parent=11 // pred_check
          %p495 = pneg %p235
        $region38: #{tpu_custom_call.1} parent=11 // pred_check_branch
          %497 = sbr.rel (%p495) target = $region40
        $region39: #{tpu_custom_call.1} parent=11 // pred_region
          %499 = vsyncadd [#allocation12], 0
          %s500 = sshll.u32 %s8, 4
          %s501 = int_to_ptr.hbm [resolvable:$true] %s500
          %s502 = sshll.u32 [#allocation11], 4
          %s503 = int_to_ptr.vmem [resolvable:$true] %s502
          %508 = dma.hbm_to_vmem [thread:$0]  %s501, 1024, %s503, [#allocation12], 64, 64, 4
        $region40: #{tpu_custom_call.1} parent=11 // pred_fallthru
          _
        // Predicated region
        $region41: #{tpu_custom_call.1} parent=11 // pred_check
          %p509 = pneg %p256
        $region42: #{tpu_custom_call.1} parent=11 // pred_check_branch
          %511 = sbr.rel (%p509) target = $region44
        $region43: #{tpu_custom_call.1} parent=11 // pred_region
          _
        $region44: #{tpu_custom_call.1} parent=11 // pred_fallthru
          _
        // Predicated region
        $region45: #{tpu_custom_call.1} parent=11 // pred_check
          %p512 = pneg %p277
        $region46: #{tpu_custom_call.1} parent=11 // pred_check_branch
          %514 = sbr.rel (%p512) target = $region48
        $region47: #{tpu_custom_call.1} parent=11 // pred_region
          %516 = vsyncadd [#allocation12], 0
          %s517 = sshll.u32 %s10, 4
          %s518 = int_to_ptr.hbm [resolvable:$true] %s517
          %s519 = sshll.u32 [#allocation13], 4
          %s520 = int_to_ptr.vmem [resolvable:$true] %s519
          %525 = dma.hbm_to_vmem [thread:$0]  %s518, 1024, %s520, [#allocation12], 64, 64, 4
        $region48: #{tpu_custom_call.1} parent=11 // pred_fallthru
          _
        // Predicated region
        $region49: #{tpu_custom_call.1} parent=11 // pred_check
          %p526 = pneg %p298
        $region50: #{tpu_custom_call.1} parent=11 // pred_check_branch
          %528 = sbr.rel (%p526) target = $region52
        $region51: #{tpu_custom_call.1} parent=11 // pred_region
          _
        $region52: #{tpu_custom_call.1} parent=11 // pred_fallthru
          _
        // Predicated region
        $region53: #{tpu_custom_call.1} parent=11 // pred_check
          %p529 = pneg %p319
        $region54: #{tpu_custom_call.1} parent=11 // pred_check_branch
          %531 = sbr.rel (%p529) target = $region56
        $region55: #{tpu_custom_call.1} parent=11 // pred_region
          %533 = vsyncadd [#allocation15], 0
          %s534 = sshll.u32 %s12, 4
          %s535 = int_to_ptr.hbm [resolvable:$true] %s534
          %s536 = sshll.u32 [#allocation14], 4
          %s537 = int_to_ptr.vmem [resolvable:$true] %s536
          %542 = dma.hbm_to_vmem [thread:$0]  %s535, 1024, %s537, [#allocation15], 64, 64, 4
        $region56: #{tpu_custom_call.1} parent=11 // pred_fallthru
          _
        // Predicated region
        $region57: #{tpu_custom_call.1} parent=11 // pred_check
          %p543 = pneg %p340
        $region58: #{tpu_custom_call.1} parent=11 // pred_check_branch
          %545 = sbr.rel (%p543) target = $region60
        $region59: #{tpu_custom_call.1} parent=11 // pred_region
          _
        $region60: #{tpu_custom_call.1} parent=11 // pred_fallthru
          _
        // Predicated region
        $region61: #{tpu_custom_call.1} parent=11 // pred_check
          %p546 = pneg %p361
        $region62: #{tpu_custom_call.1} parent=11 // pred_check_branch
          %548 = sbr.rel (%p546) target = $region64
        $region63: #{tpu_custom_call.1} parent=11 // pred_region
          %550 = vsyncadd [#allocation15], 0
          %s551 = sshll.u32 %s14, 4
          %s552 = int_to_ptr.hbm [resolvable:$true] %s551
          %s553 = sshll.u32 [#allocation16], 4
          %s554 = int_to_ptr.vmem [resolvable:$true] %s553
          %559 = dma.hbm_to_vmem [thread:$0]  %s552, 448, %s554, [#allocation15], 64, 64, 4
        $region64: #{tpu_custom_call.1} parent=11 // pred_fallthru
          _
        // Predicated region
        $region65: #{tpu_custom_call.1} parent=11 // pred_check
          %p560 = pneg %p382
        $region66: #{tpu_custom_call.1} parent=11 // pred_check_branch
          %562 = sbr.rel (%p560) target = $region68
        $region67: #{tpu_custom_call.1} parent=11 // pred_region
          %564 = vsyncadd [#allocation18], 0
          %s565 = sshll.u32 %s15, 4
          %s566 = int_to_ptr.hbm [resolvable:$true] %s565
          %s567 = sshll.u32 [#allocation17], 4
          %s568 = int_to_ptr.vmem [resolvable:$true] %s567
          %573 = dma.hbm_to_vmem [thread:$0]  %s566, 1024, %s568, [#allocation18], 64, 64, 4
        $region68: #{tpu_custom_call.1} parent=11 // pred_fallthru
          _
        // Predicated region
        $region69: #{tpu_custom_call.1} parent=11 // pred_check
          %p574 = pneg %p403
        $region70: #{tpu_custom_call.1} parent=11 // pred_check_branch
          %576 = sbr.rel (%p574) target = $region72
        $region71: #{tpu_custom_call.1} parent=11 // pred_region
          _
        $region72: #{tpu_custom_call.1} parent=11 // pred_fallthru
          _
      $region12: #{tpu_custom_call.1} parent=5 // pred_fallthru
        _
      %p577 = scmp.lt.s32.totalorder %s36, 2
      // Predicated region
      $region73: #{tpu_custom_call.1} parent=5 // pred_check
        %p578 = pneg %p577
      $region74: #{tpu_custom_call.1} parent=5 // pred_check_branch
        %580 = sbr.rel (%p578) target = $region76
      $region75: #{tpu_custom_call.1} parent=5 // pred_region
        // Predicated region
        $region77: #{tpu_custom_call.1} parent=75 // pred_check
          %p581 = pneg %p56
        $region78: #{tpu_custom_call.1} parent=75 // pred_check_branch
          %583 = sbr.rel (%p581) target = $region80
        $region79: #{tpu_custom_call.1} parent=75 // pred_region
          %s584 = sand.u32 %s46, 1
          %s585 = scalar_lea.sflag [#allocation3], %s584
          %s586 = sand.u32 %s46, 1
          %s587 = smul.addr %s586, 8
          %s588 = scalar_lea.vmem [#allocation2], %s587
          %590 = vsyncadd %s585, 0
          %s591 = smul.addr %s36, 8
          %s592 = scalar_lea.hbm %s0, %s591
          %s594 = sshll.u32 %s592, 4
          %s595 = int_to_ptr.hbm [resolvable:$true] %s594
          %s596 = sshll.u32 %s588, 4
          %s597 = int_to_ptr.vmem [resolvable:$true] %s596
          %599 = dma.hbm_to_vmem [thread:$0]  %s595, 128, %s597, %s585
        $region80: #{tpu_custom_call.1} parent=75 // pred_fallthru
          _
        // Predicated region
        $region81: #{tpu_custom_call.1} parent=75 // pred_check
          %p600 = pneg %p82
        $region82: #{tpu_custom_call.1} parent=75 // pred_check_branch
          %602 = sbr.rel (%p600) target = $region84
        $region83: #{tpu_custom_call.1} parent=75 // pred_region
          %s603 = sand.u32 %s36, 1
          %s604 = scalar_lea.sflag [#allocation6], %s603
          %s605 = sand.u32 %s72, 1
          %s606 = smul.addr %s605, 8
          %s607 = scalar_lea.vmem [#allocation5], %s606
          %609 = vsyncadd %s604, 0
          %s610 = smul.addr %s36, 8
          %s611 = scalar_lea.hbm %s1, %s610
          %s613 = sshll.u32 %s611, 4
          %s614 = int_to_ptr.hbm [resolvable:$true] %s613
          %s615 = sshll.u32 %s607, 4
          %s616 = int_to_ptr.vmem [resolvable:$true] %s615
          %618 = dma.hbm_to_vmem [thread:$0]  %s614, 128, %s616, %s604
        $region84: #{tpu_custom_call.1} parent=75 // pred_fallthru
          _
      $region76: #{tpu_custom_call.1} parent=5 // pred_fallthru
        _
      %p619 = scmp.le.s32.totalorder 1, %s36
      %p620 = scmp.lt.s32.totalorder %s36, 3
      %p621 = pnand %p619, %p620
      %p622 = pneg %p621
      // Predicated region
      $region85: #{tpu_custom_call.1} parent=5 // pred_check
        _
      $region86: #{tpu_custom_call.1} parent=5 // pred_check_branch
        %624 = sbr.rel (%p621) target = $region88
      $region87: #{tpu_custom_call.1} parent=5 // pred_region
        %s625 = ssub.s32 %s36, 1
        %s626 = sand.u32 %s49, 1
        %s627 = scalar_lea.sflag [#allocation3], %s626
        %s628 = sand.u32 %s49, 1
        %s629 = smul.addr %s628, 8
        %s630 = scalar_lea.vmem [#allocation2], %s629
        // Predicated region
        $region89: #{tpu_custom_call.1} parent=87 // pred_check
          %p631 = pneg %p62
        $region90: #{tpu_custom_call.1} parent=87 // pred_check_branch
          %633 = sbr.rel (%p631) target = $region92
        $region91: #{tpu_custom_call.1} parent=87 // pred_region
          %635 = dma.done %s627, 128
        $region92: #{tpu_custom_call.1} parent=87 // pred_fallthru
          _
        %s636 = sand.u32 %s41, 1
        %s637 = scalar_lea.sflag [#allocation6], %s636
        %s638 = sand.u32 %s75, 1
        %s639 = smul.addr %s638, 8
        %s640 = scalar_lea.vmem [#allocation5], %s639
        // Predicated region
        $region93: #{tpu_custom_call.1} parent=87 // pred_check
          %p641 = pneg %p88
        $region94: #{tpu_custom_call.1} parent=87 // pred_check_branch
          %643 = sbr.rel (%p641) target = $region96
        $region95: #{tpu_custom_call.1} parent=87 // pred_region
          %645 = dma.done %s637, 128
        $region96: #{tpu_custom_call.1} parent=87 // pred_fallthru
          _
        // Predicated region
        $region97: #{tpu_custom_call.1} parent=87 // pred_check
          %p646 = pneg %p109
        $region98: #{tpu_custom_call.1} parent=87 // pred_check_branch
          %648 = sbr.rel (%p646) target = $region100
        $region99: #{tpu_custom_call.1} parent=87 // pred_region
          %650 = dma.done [#allocation6], 448
        $region100: #{tpu_custom_call.1} parent=87 // pred_fallthru
          _
        // Predicated region
        $region101: #{tpu_custom_call.1} parent=87 // pred_check
          %p651 = pneg %p151
        $region102: #{tpu_custom_call.1} parent=87 // pred_check_branch
          %653 = sbr.rel (%p651) target = $region104
        $region103: #{tpu_custom_call.1} parent=87 // pred_region
          %655 = dma.done [#allocation9], 1024
        $region104: #{tpu_custom_call.1} parent=87 // pred_fallthru
          _
        // Predicated region
        $region105: #{tpu_custom_call.1} parent=87 // pred_check
          %p656 = pneg %p193
        $region106: #{tpu_custom_call.1} parent=87 // pred_check_branch
          %658 = sbr.rel (%p656) target = $region108
        $region107: #{tpu_custom_call.1} parent=87 // pred_region
          %660 = dma.done [#allocation9], 1024
        $region108: #{tpu_custom_call.1} parent=87 // pred_fallthru
          _
        // Predicated region
        $region109: #{tpu_custom_call.1} parent=87 // pred_check
          %p661 = pneg %p235
        $region110: #{tpu_custom_call.1} parent=87 // pred_check_branch
          %663 = sbr.rel (%p661) target = $region112
        $region111: #{tpu_custom_call.1} parent=87 // pred_region
          %665 = dma.done [#allocation12], 1024
        $region112: #{tpu_custom_call.1} parent=87 // pred_fallthru
          _
        // Predicated region
        $region113: #{tpu_custom_call.1} parent=87 // pred_check
          %p666 = pneg %p277
        $region114: #{tpu_custom_call.1} parent=87 // pred_check_branch
          %668 = sbr.rel (%p666) target = $region116
        $region115: #{tpu_custom_call.1} parent=87 // pred_region
          %670 = dma.done [#allocation12], 1024
        $region116: #{tpu_custom_call.1} parent=87 // pred_fallthru
          _
        // Predicated region
        $region117: #{tpu_custom_call.1} parent=87 // pred_check
          %p671 = pneg %p319
        $region118: #{tpu_custom_call.1} parent=87 // pred_check_branch
          %673 = sbr.rel (%p671) target = $region120
        $region119: #{tpu_custom_call.1} parent=87 // pred_region
          %675 = dma.done [#allocation15], 1024
        $region120: #{tpu_custom_call.1} parent=87 // pred_fallthru
          _
        // Predicated region
        $region121: #{tpu_custom_call.1} parent=87 // pred_check
          %p676 = pneg %p361
        $region122: #{tpu_custom_call.1} parent=87 // pred_check_branch
          %678 = sbr.rel (%p676) target = $region124
        $region123: #{tpu_custom_call.1} parent=87 // pred_region
          %680 = dma.done [#allocation15], 448
        $region124: #{tpu_custom_call.1} parent=87 // pred_fallthru
          _
        // Predicated region
        $region125: #{tpu_custom_call.1} parent=87 // pred_check
          %p681 = pneg %p382
        $region126: #{tpu_custom_call.1} parent=87 // pred_check_branch
          %683 = sbr.rel (%p681) target = $region128
        $region127: #{tpu_custom_call.1} parent=87 // pred_region
          %685 = dma.done [#allocation18], 1024
        $region128: #{tpu_custom_call.1} parent=87 // pred_fallthru
          _
        %s686 = sand.u32 %s49, 1
        %s687 = scalar_lea.sflag [#allocation3], %s686
        %s688 = sand.u32 %s49, 1
        %s689 = smul.addr %s688, 8
        %s690 = scalar_lea.vmem [#allocation2], %s689
        %p691 = pneg %p62
        %p692 = pneg %p59
        %s693 = sand.u32 %s41, 1
        %s694 = scalar_lea.sflag [#allocation6], %s693
        %s695 = sand.u32 %s75, 1
        %s696 = smul.addr %s695, 8
        %s697 = scalar_lea.vmem [#allocation5], %s696
        %p698 = pneg %p88
        %p699 = pneg %p85
        %p700 = pneg %p109
        %p701 = pneg %p106
        %p702 = pneg %p130
        %p703 = pneg %p127
        %p704 = pneg %p151
        %p705 = pneg %p148
        %p706 = pneg %p172
        %p707 = pneg %p169
        %p708 = pneg %p193
        %p709 = pneg %p190
        %p710 = pneg %p214
        %p711 = pneg %p211
        %p712 = pneg %p235
        %p713 = pneg %p232
        %p714 = pneg %p256
        %p715 = pneg %p253
        %p716 = pneg %p277
        %p717 = pneg %p274
        %p718 = pneg %p298
        %p719 = pneg %p295
        %p720 = pneg %p319
        %p721 = pneg %p316
        %p722 = pneg %p340
        %p723 = pneg %p337
        %p724 = pneg %p361
        %p725 = pneg %p358
        %p726 = pneg %p382
        %p727 = pneg %p379
        %p728 = pneg %p403
        %p729 = pneg %p400
        %p730 = pneg %p429
        %p731 = pneg %p426
        %s732 = sand.u32 %s416, 1
        %s733 = scalar_lea.sflag [#allocation4], %s732
        %s734 = sand.u32 %s416, 1
        %s735 = smul.addr %s734, 8
        %s736 = scalar_lea.vmem [#allocation19], %s735
        %v738 = vld [vmem:[%s630] sm:$0xff]
        %v739 = vpack.c.bf16 %v738, %v738
        %v740 = vld [vmem:[#allocation7] sm:$0xf]
        %v741 = vld [vmem:[#allocation7 + $0x4] sm:$0xf]
        %v742 = vld [vmem:[#allocation7 + $0x8] sm:$0xf]
        %v743 = vld [vmem:[#allocation7 + $0xc] sm:$0xf]
        %v744 = vld [vmem:[#allocation7 + $0x10] sm:$0xf]
        %v745 = vld [vmem:[#allocation7 + $0x14] sm:$0xf]
        %v746 = vld [vmem:[#allocation7 + $0x18] sm:$0x3]
        %v747 = vld [vmem:[%s3] sm:$0x1]
        %v749 = vperm.slane %v747, 0
        %v758 = vunpack.c.l.b16 %v740
        %v759 = vunpack.c.l.b16 %v741
        %v760 = vunpack.c.l.b16 %v742
        %v761 = vunpack.c.l.b16 %v743
        %v762 = vunpack.c.l.b16 %v744
        %v763 = vunpack.c.l.b16 %v745
        %v764 = vunpack.c.l.b16 %v746
        %v765 = vpack.c.b16 %v759, %v758
        %v766 = vpack.c.b16 %v761, %v760
        %v767 = vpack.c.b16 %v763, %v762
        %v768 = vpack.c.b16 %v764, %v764
        %vm772 = vcmask 424960
        %v774 = vsel %vm772, %v739, 0
        %vm776 = vcmask 1041408
        %v778 = vsel %vm776, %v768, 0
        %780 = vmatpush.bf16.msra.mxu0 0
        %781 = vmatpush.bf16.msra.mxu0 0
        %782 = vmatpush.bf16.msra.mxu0 0
        %783 = vmatpush.bf16.msra.mxu0 0
        %784 = vmatpush.bf16.msra.mxu0 %v778
        %785 = vmatpush.bf16.msra.mxu0 %v767
        %786 = vmatpush.bf16.msra.mxu0 %v766
        %787 = vmatpush.bf16.msra.mxu0 %v765
        %788 = vmatmul.bf16.gmra.mxu0 %v774
        %v789 = vpop.f32.mrf.mxu0
        %v790 = vadd.f32 %v749, %v789
        %v791 = vpop.f32.mrf.mxu0
        %792 = vdwg.mxu0
        %vm793 = vcmp.ge.f32.partialorder %v790, 0.0
        %v794 = vmul.f32 %v790, 0.15
        %v795 = vsel %vm793, %v790, %v794
        %v796 = vpack.c.bf16 %v795, %v795
        %v797 = vld [vmem:[#allocation8] sm:$0xf]
        %v798 = vld [vmem:[#allocation8 + $0x4] sm:$0xf]
        %v799 = vld [vmem:[#allocation8 + $0x8] sm:$0xf]
        %v800 = vld [vmem:[#allocation8 + $0xc] sm:$0xf]
        %v801 = vld [vmem:[#allocation8 + $0x10] sm:$0xf]
        %v802 = vld [vmem:[#allocation8 + $0x14] sm:$0xf]
        %v803 = vld [vmem:[#allocation8 + $0x18] sm:$0xf]
        %v804 = vld [vmem:[#allocation8 + $0x1c] sm:$0xf]
        %v805 = vld [vmem:[#allocation8 + $0x20] sm:$0xf]
        %v806 = vld [vmem:[#allocation8 + $0x24] sm:$0xf]
        %v807 = vld [vmem:[#allocation8 + $0x28] sm:$0xf]
        %v808 = vld [vmem:[#allocation8 + $0x2c] sm:$0xf]
        %v809 = vld [vmem:[#allocation8 + $0x30] sm:$0xf]
        %v810 = vld [vmem:[#allocation8 + $0x34] sm:$0xf]
        %v811 = vld [vmem:[#allocation8 + $0x38] sm:$0xf]
        %v812 = vld [vmem:[#allocation8 + $0x3c] sm:$0xf]
        %v813 = vld [vmem:[%s5] sm:$0x1]
        %v815 = vperm.slane %v813, 0
        %v833 = vunpack.c.l.b16 %v797
        %v834 = vunpack.c.l.b16 %v798
        %v835 = vunpack.c.l.b16 %v799
        %v836 = vunpack.c.l.b16 %v800
        %v837 = vunpack.c.l.b16 %v801
        %v838 = vunpack.c.l.b16 %v802
        %v839 = vunpack.c.l.b16 %v803
        %v840 = vunpack.c.l.b16 %v804
        %v841 = vunpack.c.l.b16 %v805
        %v842 = vunpack.c.l.b16 %v806
        %v843 = vunpack.c.l.b16 %v807
        %v844 = vunpack.c.l.b16 %v808
        %v845 = vunpack.c.l.b16 %v809
        %v846 = vunpack.c.l.b16 %v810
        %v847 = vunpack.c.l.b16 %v811
        %v848 = vunpack.c.l.b16 %v812
        %v849 = vpack.c.b16 %v834, %v833
        %v850 = vpack.c.b16 %v836, %v835
        %v851 = vpack.c.b16 %v838, %v837
        %v852 = vpack.c.b16 %v840, %v839
        %v853 = vpack.c.b16 %v842, %v841
        %v854 = vpack.c.b16 %v844, %v843
        %v855 = vpack.c.b16 %v846, %v845
        %v856 = vpack.c.b16 %v848, %v847
        %865 = vmatpush.bf16.msra.mxu0 %v856
        %866 = vmatpush.bf16.msra.mxu0 %v855
        %867 = vmatpush.bf16.msra.mxu0 %v854
        %868 = vmatpush.bf16.msra.mxu0 %v853
        %869 = vmatpush.bf16.msra.mxu0 %v852
        %870 = vmatpush.bf16.msra.mxu0 %v851
        %871 = vmatpush.bf16.msra.mxu0 %v850
        %872 = vmatpush.bf16.msra.mxu0 %v849
        %873 = vmatmul.bf16.gmra.mxu0 %v796
        %v874 = vpop.f32.mrf.mxu0
        %v875 = vadd.f32 %v815, %v874
        %v876 = vpop.f32.mrf.mxu0
        %877 = vdwg.mxu0
        %vm878 = vcmp.ge.f32.partialorder %v875, 0.0
        %v879 = vmul.f32 %v875, 0.15
        %v880 = vsel %vm878, %v875, %v879
        %v881 = vpack.c.bf16 %v880, %v880
        %v882 = vld [vmem:[#allocation10] sm:$0xf]
        %v883 = vld [vmem:[#allocation10 + $0x4] sm:$0xf]
        %v884 = vld [vmem:[#allocation10 + $0x8] sm:$0xf]
        %v885 = vld [vmem:[#allocation10 + $0xc] sm:$0xf]
        %v886 = vld [vmem:[#allocation10 + $0x10] sm:$0xf]
        %v887 = vld [vmem:[#allocation10 + $0x14] sm:$0xf]
        %v888 = vld [vmem:[#allocation10 + $0x18] sm:$0xf]
        %v889 = vld [vmem:[#allocation10 + $0x1c] sm:$0xf]
        %v890 = vld [vmem:[#allocation10 + $0x20] sm:$0xf]
        %v891 = vld [vmem:[#allocation10 + $0x24] sm:$0xf]
        %v892 = vld [vmem:[#allocation10 + $0x28] sm:$0xf]
        %v893 = vld [vmem:[#allocation10 + $0x2c] sm:$0xf]
        %v894 = vld [vmem:[#allocation10 + $0x30] sm:$0xf]
        %v895 = vld [vmem:[#allocation10 + $0x34] sm:$0xf]
        %v896 = vld [vmem:[#allocation10 + $0x38] sm:$0xf]
        %v897 = vld [vmem:[#allocation10 + $0x3c] sm:$0xf]
        %v898 = vld [vmem:[%s7] sm:$0x1]
        %v900 = vperm.slane %v898, 0
        %v918 = vunpack.c.l.b16 %v882
        %v919 = vunpack.c.l.b16 %v883
        %v920 = vunpack.c.l.b16 %v884
        %v921 = vunpack.c.l.b16 %v885
        %v922 = vunpack.c.l.b16 %v886
        %v923 = vunpack.c.l.b16 %v887
        %v924 = vunpack.c.l.b16 %v888
        %v925 = vunpack.c.l.b16 %v889
        %v926 = vunpack.c.l.b16 %v890
        %v927 = vunpack.c.l.b16 %v891
        %v928 = vunpack.c.l.b16 %v892
        %v929 = vunpack.c.l.b16 %v893
        %v930 = vunpack.c.l.b16 %v894
        %v931 = vunpack.c.l.b16 %v895
        %v932 = vunpack.c.l.b16 %v896
        %v933 = vunpack.c.l.b16 %v897
        %v934 = vpack.c.b16 %v919, %v918
        %v935 = vpack.c.b16 %v921, %v920
        %v936 = vpack.c.b16 %v923, %v922
        %v937 = vpack.c.b16 %v925, %v924
        %v938 = vpack.c.b16 %v927, %v926
        %v939 = vpack.c.b16 %v929, %v928
        %v940 = vpack.c.b16 %v931, %v930
        %v941 = vpack.c.b16 %v933, %v932
        %950 = vmatpush.bf16.msra.mxu0 %v941
        %951 = vmatpush.bf16.msra.mxu0 %v940
        %952 = vmatpush.bf16.msra.mxu0 %v939
        %953 = vmatpush.bf16.msra.mxu0 %v938
        %954 = vmatpush.bf16.msra.mxu0 %v937
        %955 = vmatpush.bf16.msra.mxu0 %v936
        %956 = vmatpush.bf16.msra.mxu0 %v935
        %957 = vmatpush.bf16.msra.mxu0 %v934
        %958 = vmatmul.bf16.gmra.mxu0 %v881
        %v959 = vpop.f32.mrf.mxu0
        %v960 = vadd.f32 %v900, %v959
        %v961 = vpop.f32.mrf.mxu0
        %962 = vdwg.mxu0
        %vm963 = vcmp.ge.f32.partialorder %v960, 0.0
        %v964 = vmul.f32 %v960, 0.15
        %v965 = vsel %vm963, %v960, %v964
        %v966 = vpack.c.bf16 %v965, %v965
        %v967 = vld [vmem:[#allocation11] sm:$0xf]
        %v968 = vld [vmem:[#allocation11 + $0x4] sm:$0xf]
        %v969 = vld [vmem:[#allocation11 + $0x8] sm:$0xf]
        %v970 = vld [vmem:[#allocation11 + $0xc] sm:$0xf]
        %v971 = vld [vmem:[#allocation11 + $0x10] sm:$0xf]
        %v972 = vld [vmem:[#allocation11 + $0x14] sm:$0xf]
        %v973 = vld [vmem:[#allocation11 + $0x18] sm:$0xf]
        %v974 = vld [vmem:[#allocation11 + $0x1c] sm:$0xf]
        %v975 = vld [vmem:[#allocation11 + $0x20] sm:$0xf]
        %v976 = vld [vmem:[#allocation11 + $0x24] sm:$0xf]
        %v977 = vld [vmem:[#allocation11 + $0x28] sm:$0xf]
        %v978 = vld [vmem:[#allocation11 + $0x2c] sm:$0xf]
        %v979 = vld [vmem:[#allocation11 + $0x30] sm:$0xf]
        %v980 = vld [vmem:[#allocation11 + $0x34] sm:$0xf]
        %v981 = vld [vmem:[#allocation11 + $0x38] sm:$0xf]
        %v982 = vld [vmem:[#allocation11 + $0x3c] sm:$0xf]
        %v983 = vld [vmem:[%s9] sm:$0x1]
        %v985 = vperm.slane %v983, 0
        %v1003 = vunpack.c.l.b16 %v967
        %v1004 = vunpack.c.l.b16 %v968
        %v1005 = vunpack.c.l.b16 %v969
        %v1006 = vunpack.c.l.b16 %v970
        %v1007 = vunpack.c.l.b16 %v971
        %v1008 = vunpack.c.l.b16 %v972
        %v1009 = vunpack.c.l.b16 %v973
        %v1010 = vunpack.c.l.b16 %v974
        %v1011 = vunpack.c.l.b16 %v975
        %v1012 = vunpack.c.l.b16 %v976
        %v1013 = vunpack.c.l.b16 %v977
        %v1014 = vunpack.c.l.b16 %v978
        %v1015 = vunpack.c.l.b16 %v979
        %v1016 = vunpack.c.l.b16 %v980
        %v1017 = vunpack.c.l.b16 %v981
        %v1018 = vunpack.c.l.b16 %v982
        %v1019 = vpack.c.b16 %v1004, %v1003
        %v1020 = vpack.c.b16 %v1006, %v1005
        %v1021 = vpack.c.b16 %v1008, %v1007
        %v1022 = vpack.c.b16 %v1010, %v1009
        %v1023 = vpack.c.b16 %v1012, %v1011
        %v1024 = vpack.c.b16 %v1014, %v1013
        %v1025 = vpack.c.b16 %v1016, %v1015
        %v1026 = vpack.c.b16 %v1018, %v1017
        %1035 = vmatpush.bf16.msra.mxu0 %v1026
        %1036 = vmatpush.bf16.msra.mxu0 %v1025
        %1037 = vmatpush.bf16.msra.mxu0 %v1024
        %1038 = vmatpush.bf16.msra.mxu0 %v1023
        %1039 = vmatpush.bf16.msra.mxu0 %v1022
        %1040 = vmatpush.bf16.msra.mxu0 %v1021
        %1041 = vmatpush.bf16.msra.mxu0 %v1020
        %1042 = vmatpush.bf16.msra.mxu0 %v1019
        %1043 = vmatmul.bf16.gmra.mxu0 %v966
        %v1044 = vpop.f32.mrf.mxu0
        %v1045 = vadd.f32 %v985, %v1044
        %v1046 = vpop.f32.mrf.mxu0
        %1047 = vdwg.mxu0
        %vm1048 = vcmp.ge.f32.partialorder %v1045, 0.0
        %v1049 = vmul.f32 %v1045, 0.15
        %v1050 = vsel %vm1048, %v1045, %v1049
        %v1051 = vpack.c.bf16 %v1050, %v1050
        %v1052 = vld [vmem:[#allocation13] sm:$0xf]
        %v1053 = vld [vmem:[#allocation13 + $0x4] sm:$0xf]
        %v1054 = vld [vmem:[#allocation13 + $0x8] sm:$0xf]
        %v1055 = vld [vmem:[#allocation13 + $0xc] sm:$0xf]
        %v1056 = vld [vmem:[#allocation13 + $0x10] sm:$0xf]
        %v1057 = vld [vmem:[#allocation13 + $0x14] sm:$0xf]
        %v1058 = vld [vmem:[#allocation13 + $0x18] sm:$0xf]
        %v1059 = vld [vmem:[#allocation13 + $0x1c] sm:$0xf]
        %v1060 = vld [vmem:[#allocation13 + $0x20] sm:$0xf]
        %v1061 = vld [vmem:[#allocation13 + $0x24] sm:$0xf]
        %v1062 = vld [vmem:[#allocation13 + $0x28] sm:$0xf]
        %v1063 = vld [vmem:[#allocation13 + $0x2c] sm:$0xf]
        %v1064 = vld [vmem:[#allocation13 + $0x30] sm:$0xf]
        %v1065 = vld [vmem:[#allocation13 + $0x34] sm:$0xf]
        %v1066 = vld [vmem:[#allocation13 + $0x38] sm:$0xf]
        %v1067 = vld [vmem:[#allocation13 + $0x3c] sm:$0xf]
        %v1068 = vld [vmem:[%s11] sm:$0x1]
        %v1070 = vperm.slane %v1068, 0
        %v1088 = vunpack.c.l.b16 %v1052
        %v1089 = vunpack.c.l.b16 %v1053
        %v1090 = vunpack.c.l.b16 %v1054
        %v1091 = vunpack.c.l.b16 %v1055
        %v1092 = vunpack.c.l.b16 %v1056
        %v1093 = vunpack.c.l.b16 %v1057
        %v1094 = vunpack.c.l.b16 %v1058
        %v1095 = vunpack.c.l.b16 %v1059
        %v1096 = vunpack.c.l.b16 %v1060
        %v1097 = vunpack.c.l.b16 %v1061
        %v1098 = vunpack.c.l.b16 %v1062
        %v1099 = vunpack.c.l.b16 %v1063
        %v1100 = vunpack.c.l.b16 %v1064
        %v1101 = vunpack.c.l.b16 %v1065
        %v1102 = vunpack.c.l.b16 %v1066
        %v1103 = vunpack.c.l.b16 %v1067
        %v1104 = vpack.c.b16 %v1089, %v1088
        %v1105 = vpack.c.b16 %v1091, %v1090
        %v1106 = vpack.c.b16 %v1093, %v1092
        %v1107 = vpack.c.b16 %v1095, %v1094
        %v1108 = vpack.c.b16 %v1097, %v1096
        %v1109 = vpack.c.b16 %v1099, %v1098
        %v1110 = vpack.c.b16 %v1101, %v1100
        %v1111 = vpack.c.b16 %v1103, %v1102
        %1120 = vmatpush.bf16.msra.mxu0 %v1111
        %1121 = vmatpush.bf16.msra.mxu0 %v1110
        %1122 = vmatpush.bf16.msra.mxu0 %v1109
        %1123 = vmatpush.bf16.msra.mxu0 %v1108
        %1124 = vmatpush.bf16.msra.mxu0 %v1107
        %1125 = vmatpush.bf16.msra.mxu0 %v1106
        %1126 = vmatpush.bf16.msra.mxu0 %v1105
        %1127 = vmatpush.bf16.msra.mxu0 %v1104
        %1128 = vmatmul.bf16.gmra.mxu0 %v1051
        %v1129 = vpop.f32.mrf.mxu0
        %v1130 = vadd.f32 %v1070, %v1129
        %v1131 = vpop.f32.mrf.mxu0
        %1132 = vdwg.mxu0
        %vm1133 = vcmp.ge.f32.partialorder %v1130, 0.0
        %v1134 = vmul.f32 %v1130, 0.15
        %v1135 = vsel %vm1133, %v1130, %v1134
        %v1136 = vpack.c.bf16 %v1135, %v1135
        %v1137 = vld [vmem:[#allocation14] sm:$0xf]
        %v1138 = vld [vmem:[#allocation14 + $0x4] sm:$0xf]
        %v1139 = vld [vmem:[#allocation14 + $0x8] sm:$0xf]
        %v1140 = vld [vmem:[#allocation14 + $0xc] sm:$0xf]
        %v1141 = vld [vmem:[#allocation14 + $0x10] sm:$0xf]
        %v1142 = vld [vmem:[#allocation14 + $0x14] sm:$0xf]
        %v1143 = vld [vmem:[#allocation14 + $0x18] sm:$0xf]
        %v1144 = vld [vmem:[#allocation14 + $0x1c] sm:$0xf]
        %v1145 = vld [vmem:[#allocation14 + $0x20] sm:$0xf]
        %v1146 = vld [vmem:[#allocation14 + $0x24] sm:$0xf]
        %v1147 = vld [vmem:[#allocation14 + $0x28] sm:$0xf]
        %v1148 = vld [vmem:[#allocation14 + $0x2c] sm:$0xf]
        %v1149 = vld [vmem:[#allocation14 + $0x30] sm:$0xf]
        %v1150 = vld [vmem:[#allocation14 + $0x34] sm:$0xf]
        %v1151 = vld [vmem:[#allocation14 + $0x38] sm:$0xf]
        %v1152 = vld [vmem:[#allocation14 + $0x3c] sm:$0xf]
        %v1153 = vld [vmem:[%s13] sm:$0x1]
        %v1155 = vperm.slane %v1153, 0
        %v1173 = vunpack.c.l.b16 %v1137
        %v1174 = vunpack.c.l.b16 %v1138
        %v1175 = vunpack.c.l.b16 %v1139
        %v1176 = vunpack.c.l.b16 %v1140
        %v1177 = vunpack.c.l.b16 %v1141
        %v1178 = vunpack.c.l.b16 %v1142
        %v1179 = vunpack.c.l.b16 %v1143
        %v1180 = vunpack.c.l.b16 %v1144
        %v1181 = vunpack.c.l.b16 %v1145
        %v1182 = vunpack.c.l.b16 %v1146
        %v1183 = vunpack.c.l.b16 %v1147
        %v1184 = vunpack.c.l.b16 %v1148
        %v1185 = vunpack.c.l.b16 %v1149
        %v1186 = vunpack.c.l.b16 %v1150
        %v1187 = vunpack.c.l.b16 %v1151
        %v1188 = vunpack.c.l.b16 %v1152
        %v1189 = vpack.c.b16 %v1174, %v1173
        %v1190 = vpack.c.b16 %v1176, %v1175
        %v1191 = vpack.c.b16 %v1178, %v1177
        %v1192 = vpack.c.b16 %v1180, %v1179
        %v1193 = vpack.c.b16 %v1182, %v1181
        %v1194 = vpack.c.b16 %v1184, %v1183
        %v1195 = vpack.c.b16 %v1186, %v1185
        %v1196 = vpack.c.b16 %v1188, %v1187
        %1205 = vmatpush.bf16.msra.mxu0 %v1196
        %1206 = vmatpush.bf16.msra.mxu0 %v1195
        %1207 = vmatpush.bf16.msra.mxu0 %v1194
        %1208 = vmatpush.bf16.msra.mxu0 %v1193
        %1209 = vmatpush.bf16.msra.mxu0 %v1192
        %1210 = vmatpush.bf16.msra.mxu0 %v1191
        %1211 = vmatpush.bf16.msra.mxu0 %v1190
        %1212 = vmatpush.bf16.msra.mxu0 %v1189
        %1213 = vmatmul.bf16.gmra.mxu0 %v1136
        %v1214 = vpop.f32.mrf.mxu0
        %v1215 = vadd.f32 %v1155, %v1214
        %v1216 = vpop.f32.mrf.mxu0
        %1217 = vdwg.mxu0
        %v1218 = vld [vmem:[%s640] sm:$0xff]
        %v1219 = vpack.c.bf16 %v1218, %v1218
        %v1220 = vld [vmem:[#allocation16] sm:$0xf]
        %v1221 = vld [vmem:[#allocation16 + $0x4] sm:$0xf]
        %v1222 = vld [vmem:[#allocation16 + $0x8] sm:$0xf]
        %v1223 = vld [vmem:[#allocation16 + $0xc] sm:$0xf]
        %v1224 = vld [vmem:[#allocation16 + $0x10] sm:$0xf]
        %v1225 = vld [vmem:[#allocation16 + $0x14] sm:$0xf]
        %v1226 = vld [vmem:[#allocation16 + $0x18] sm:$0x3]
        %v1234 = vunpack.c.l.b16 %v1220
        %v1235 = vunpack.c.l.b16 %v1221
        %v1236 = vunpack.c.l.b16 %v1222
        %v1237 = vunpack.c.l.b16 %v1223
        %v1238 = vunpack.c.l.b16 %v1224
        %v1239 = vunpack.c.l.b16 %v1225
        %v1240 = vunpack.c.l.b16 %v1226
        %v1241 = vpack.c.b16 %v1235, %v1234
        %v1242 = vpack.c.b16 %v1237, %v1236
        %v1243 = vpack.c.b16 %v1239, %v1238
        %v1244 = vpack.c.b16 %v1240, %v1240
        %v1249 = vsel %vm772, %v1219, 0
        %v1252 = vsel %vm776, %v1244, 0
        %1254 = vmatpush.bf16.msra.mxu0 0
        %1255 = vmatpush.bf16.msra.mxu0 0
        %1256 = vmatpush.bf16.msra.mxu0 0
        %1257 = vmatpush.bf16.msra.mxu0 0
        %1258 = vmatpush.bf16.msra.mxu0 %v1252
        %1259 = vmatpush.bf16.msra.mxu0 %v1243
        %1260 = vmatpush.bf16.msra.mxu0 %v1242
        %1261 = vmatpush.bf16.msra.mxu0 %v1241
        %1262 = vmatmul.bf16.gmra.mxu0 %v1249
        %v1263 = vpop.f32.mrf.mxu0
        %v1264 = vadd.f32 0.0, %v1263
        %v1265 = vpop.f32.mrf.mxu0
        %1266 = vdwg.mxu0
        %v1267 = vadd.f32 %v1215, %v1264
        %vm1268 = vcmp.ge.f32.partialorder %v1267, 0.0
        %v1269 = vmul.f32 %v1267, 0.15
        %v1270 = vsel %vm1268, %v1267, %v1269
        %v1271 = vpack.c.bf16 %v1270, %v1270
        %v1272 = vld [vmem:[#allocation17] sm:$0xf]
        %v1273 = vld [vmem:[#allocation17 + $0x4] sm:$0xf]
        %v1274 = vld [vmem:[#allocation17 + $0x8] sm:$0xf]
        %v1275 = vld [vmem:[#allocation17 + $0xc] sm:$0xf]
        %v1276 = vld [vmem:[#allocation17 + $0x10] sm:$0xf]
        %v1277 = vld [vmem:[#allocation17 + $0x14] sm:$0xf]
        %v1278 = vld [vmem:[#allocation17 + $0x18] sm:$0xf]
        %v1279 = vld [vmem:[#allocation17 + $0x1c] sm:$0xf]
        %v1280 = vld [vmem:[#allocation17 + $0x20] sm:$0xf]
        %v1281 = vld [vmem:[#allocation17 + $0x24] sm:$0xf]
        %v1282 = vld [vmem:[#allocation17 + $0x28] sm:$0xf]
        %v1283 = vld [vmem:[#allocation17 + $0x2c] sm:$0xf]
        %v1284 = vld [vmem:[#allocation17 + $0x30] sm:$0xf]
        %v1285 = vld [vmem:[#allocation17 + $0x34] sm:$0xf]
        %v1286 = vld [vmem:[#allocation17 + $0x38] sm:$0xf]
        %v1287 = vld [vmem:[#allocation17 + $0x3c] sm:$0xf]
        %v1288 = vld [vmem:[%s16] sm:$0x1]
        %v1290 = vperm.slane %v1288, 0
        %v1308 = vunpack.c.l.b16 %v1272
        %v1309 = vunpack.c.l.b16 %v1273
        %v1310 = vunpack.c.l.b16 %v1274
        %v1311 = vunpack.c.l.b16 %v1275
        %v1312 = vunpack.c.l.b16 %v1276
        %v1313 = vunpack.c.l.b16 %v1277
        %v1314 = vunpack.c.l.b16 %v1278
        %v1315 = vunpack.c.l.b16 %v1279
        %v1316 = vunpack.c.l.b16 %v1280
        %v1317 = vunpack.c.l.b16 %v1281
        %v1318 = vunpack.c.l.b16 %v1282
        %v1319 = vunpack.c.l.b16 %v1283
        %v1320 = vunpack.c.l.b16 %v1284
        %v1321 = vunpack.c.l.b16 %v1285
        %v1322 = vunpack.c.l.b16 %v1286
        %v1323 = vunpack.c.l.b16 %v1287
        %v1324 = vpack.c.b16 %v1309, %v1308
        %v1325 = vpack.c.b16 %v1311, %v1310
        %v1326 = vpack.c.b16 %v1313, %v1312
        %v1327 = vpack.c.b16 %v1315, %v1314
        %v1328 = vpack.c.b16 %v1317, %v1316
        %v1329 = vpack.c.b16 %v1319, %v1318
        %v1330 = vpack.c.b16 %v1321, %v1320
        %v1331 = vpack.c.b16 %v1323, %v1322
        %1340 = vmatpush.bf16.msra.mxu0 %v1331
        %1341 = vmatpush.bf16.msra.mxu0 %v1330
        %1342 = vmatpush.bf16.msra.mxu0 %v1329
        %1343 = vmatpush.bf16.msra.mxu0 %v1328
        %1344 = vmatpush.bf16.msra.mxu0 %v1327
        %1345 = vmatpush.bf16.msra.mxu0 %v1326
        %1346 = vmatpush.bf16.msra.mxu0 %v1325
        %1347 = vmatpush.bf16.msra.mxu0 %v1324
        %1348 = vmatmul.bf16.gmra.mxu0 %v1271
        %v1349 = vpop.f32.mrf.mxu0
        %v1350 = vadd.f32 %v1290, %v1349
        %v1351 = vpop.f32.mrf.mxu0
        %1352 = vdwg.mxu0
        %1353 = vst [vmem:[%s736] sm:$0xff] %v1350
        %s1354 = sand.u32 %s416, 1
        %s1355 = scalar_lea.sflag [#allocation4], %s1354
        %s1356 = sand.u32 %s416, 1
        %s1357 = smul.addr %s1356, 8
        %s1358 = scalar_lea.vmem [#allocation19], %s1357
        // Predicated region
        $region129: #{tpu_custom_call.1} parent=87 // pred_check
          %p1359 = pneg %p426
        $region130: #{tpu_custom_call.1} parent=87 // pred_check_branch
          %1361 = sbr.rel (%p1359) target = $region132
        $region131: #{tpu_custom_call.1} parent=87 // pred_region
          %1363 = vsyncadd %s1355, 0
          %s1364 = smul.addr %s41, 8
          %s1365 = scalar_lea.hbm %s17, %s1364
          %s1367 = sshll.u32 %s1358, 4
          %s1368 = int_to_ptr.vmem [resolvable:$true] %s1367
          %s1369 = sshll.u32 %s1365, 4
          %s1370 = int_to_ptr.hbm [resolvable:$true] %s1369
          %1372 = dma.vmem_to_hbm [thread:$0]  %s1368, 128, %s1370, %s1355
        $region132: #{tpu_custom_call.1} parent=87 // pred_fallthru
          _
      $region88: #{tpu_custom_call.1} parent=5 // pred_fallthru
        _
      %p1373 = scmp.le.s32.totalorder 2, %s36
      // Predicated region
      $region133: #{tpu_custom_call.1} parent=5 // pred_check
        %p1374 = pneg %p1373
      $region134: #{tpu_custom_call.1} parent=5 // pred_check_branch
        %1376 = sbr.rel (%p1374) target = $region136
      $region135: #{tpu_custom_call.1} parent=5 // pred_region
        %s1377 = ssub.s32 %s36, 2
        // Predicated region
        $region137: #{tpu_custom_call.1} parent=135 // pred_check
          %p1378 = pneg %p432
        $region138: #{tpu_custom_call.1} parent=135 // pred_check_branch
          %1380 = sbr.rel (%p1378) target = $region140
        $region139: #{tpu_custom_call.1} parent=135 // pred_region
          %s1381 = sand.u32 %s417, 1
          %s1382 = scalar_lea.sflag [#allocation4], %s1381
          %s1383 = sand.u32 %s417, 1
          %s1384 = smul.addr %s1383, 8
          %s1385 = scalar_lea.vmem [#allocation19], %s1384
          %1387 = dma.done %s1382, 128
        $region140: #{tpu_custom_call.1} parent=135 // pred_fallthru
          _
      $region136: #{tpu_custom_call.1} parent=5 // pred_fallthru
        _
    $region6: #{tpu_custom_call.1} parent=1 // loop_footer
      %s40 = sadd.s32 1, %s36
    $region7: #{tpu_custom_call.1} parent=1 // loop_footer_branch
      %35 = sbr.rel target = $region3
    $region8: #{tpu_custom_call.1} parent=1 // loop_exit
      _
    %1388 = vsyncpa [#allocation3], 1
    %s1389 = scalar_lea.sflag [#allocation3], 1
    %1390 = vsyncpa %s1389, 1
    %1391 = vsyncpa [#allocation6], 1
    %s1392 = scalar_lea.sflag [#allocation6], 1
    %1393 = vsyncpa %s1392, 1
    %1394 = vsyncpa [#allocation9], 1
    %1395 = vsyncpa [#allocation12], 1
    %1396 = vsyncpa [#allocation15], 1
    %1397 = vsyncpa [#allocation18], 1
    %1398 = vsyncpa [#allocation4], 1
    %s1399 = scalar_lea.sflag [#allocation4], 1
    %1400 = vsyncpa %s1399, 1

</llo_original>
